<compile_context>
chip_gen: v6e
topology: v6e:2x2x1
jax: 0.10.0
libtpu: 0.0.40
codegen_flags: <defaults>
</compile_context>

<pallas_src>
import jax
import jax.numpy as jnp
from jax.experimental import pallas as pl
from jax.experimental.pallas import tpu as pltpu


# ----------------------------------------------------------------------------
# Fused per-block kernel: BT samples per grid step.
# ----------------------------------------------------------------------------
def _backbone_block_kernel(conv_ref, p_ref, w_ref, o_ref):
    """conv_ref : (BT, HW, C) bf16  -- stem conv output for BT samples
    p_ref    : (16, C)     f32   -- consolidated per-channel parameters
                 rows: 0 stem_b | 1 g1 2 be1 3 mu1 4 v1 | 5 b1
                       6 g2 7 be2 8 mu2 9 v2 | 10 b2 | 11..15 padding
    w_ref    : (2, C, C)   bf16  -- stacked 1x1 conv weights (Cin, Cout)
    o_ref    : (BT, C)     f32   -- AFIM stand-in (GAP) output
    """
    bt, hw, c = conv_ref.shape
    half = c // 2
    eps = 1e-5

    # Lane mask built ONCE per invocation (JAX does not CSE iota/broadcasts).
    is_in = jax.lax.broadcasted_iota(jnp.int32, (1, 1, c), 2) < half

    def row(i):  # (1, 1, C) f32 view of one parameter row
        return p_ref[i, :].reshape(1, 1, c)

    def ibn(x3, g, be, mu_bn, var_bn):
        """IBN-a folded into a per-channel scale/shift FMA.

        First `half` channels: InstanceNorm (per-sample spatial stats).
        Last `half` channels: BatchNorm eval mode (running stats).
        """
        mu = jnp.mean(x3, axis=1, keepdims=True)          # (BT, 1, C)
        msq = jnp.mean(x3 * x3, axis=1, keepdims=True)    # (BT, 1, C)
        var = msq - mu * mu                               # biased var (IN)
        mu_eff = jnp.where(is_in, mu, mu_bn)
        var_eff = jnp.where(is_in, var, var_bn)
        scale = g * jax.lax.rsqrt(var_eff + eps)          # (BT, 1, C)
        shift = be - mu_eff * scale                       # (BT, 1, C)
        return x3 * scale + shift                         # single FMA pass

    # --- stem bias + IBN-a + ReLU (f32 elementwise) ---------------------------
    x = conv_ref[...].astype(jnp.float32) + row(0)                  # (BT,HW,C)
    resid = jnp.maximum(ibn(x, row(1), row(2), row(3), row(4)), 0.0)

    # --- 1x1 conv #1: bf16 MXU, M = BT*HW, f32 acc; bias + IBN-a + ReLU -------
    z = jnp.dot(resid.reshape(bt * hw, c).astype(jnp.bfloat16), w_ref[0],
                preferred_element_type=jnp.float32).reshape(bt, hw, c)
    z = z + row(5)
    z = jnp.maximum(ibn(z, row(6), row(7), row(8), row(9)), 0.0)

    # --- 1x1 conv #2: bf16 MXU; bias + residual add + ReLU --------------------
    z = jnp.dot(z.reshape(bt * hw, c).astype(jnp.bfloat16), w_ref[1],
                preferred_element_type=jnp.float32).reshape(bt, hw, c)
    y = jnp.maximum(z + row(10) + resid, 0.0)                       # (BT,HW,C)

    # --- AFIM stand-in: global average pool, fused epilogue -------------------
    o_ref[...] = jnp.mean(y, axis=1)                                # (BT, C)


# ----------------------------------------------------------------------------
# Parameters (synthetic, deterministic; no checkpoint load)
# ----------------------------------------------------------------------------
def init_params(key, cin=3, c=128):
    half = c // 2
    ks = jax.random.split(key, 8)

    def ibn_params(k1, k2):
        gamma = jnp.concatenate(
            [jnp.ones((1, half)), jnp.full((1, half), 0.9)], axis=-1)
        beta = jnp.concatenate(
            [jnp.zeros((1, half)), jnp.full((1, half), 0.05)], axis=-1)
        mu_bn = jnp.concatenate(
            [jnp.zeros((1, half)),
             jax.random.normal(k1, (1, half)) * 0.1], axis=-1)
        var_bn = jnp.concatenate(
            [jnp.ones((1, half)),
             jnp.abs(jax.random.normal(k2, (1, half))) * 0.1 + 1.0], axis=-1)
        return (gamma.astype(jnp.float32), beta.astype(jnp.float32),
                mu_bn.astype(jnp.float32), var_bn.astype(jnp.float32))

    g1, be1, mu1, v1 = ibn_params(ks[0], ks[1])
    g2, be2, mu2, v2 = ibn_params(ks[2], ks[3])
    return {
        "stem_w": jax.random.normal(ks[4], (3, 3, cin, c), jnp.float32) * 0.1,  # HWIO
        "stem_b": jnp.zeros((1, c), jnp.float32),
        "ibn1": (g1, be1, mu1, v1),
        "w1": jax.random.normal(ks[5], (c, c), jnp.float32) * 0.1,   # (Cin, Cout)
        "b1": jnp.zeros((1, c), jnp.float32),
        "ibn2": (g2, be2, mu2, v2),
        "w2": jax.random.normal(ks[6], (c, c), jnp.float32) * 0.1,   # (Cin, Cout)
        "b2": jnp.zeros((1, c), jnp.float32),
    }


# ----------------------------------------------------------------------------
# Forward pass: backbone(x) -> AFIM(x) -> view(N, C)
# ----------------------------------------------------------------------------
def net_ibn_forward(params, x_nchw, bt=8):
    x = jnp.transpose(x_nchw, (0, 2, 3, 1)).astype(jnp.bfloat16)     # NHWC
    n = x.shape[0]
    c = params["w1"].shape[0]

    # Stem: 3x3 stride-2 conv via XLA (K = kh*kw*Cin = 27 is MXU-starved; the
    # 1x1 convs are the matmuls worth running inside Pallas).
    conv = jax.lax.conv_general_dilated(
        x, params["stem_w"].astype(jnp.bfloat16),
        window_strides=(2, 2), padding=((1, 1), (1, 1)),
        dimension_numbers=("NHWC", "HWIO", "NHWC"),
        preferred_element_type=jnp.float32)                          # (N,Ho,Wo,C)
    ho, wo = conv.shape[1], conv.shape[2]
    hw = ho * wo
    # bf16 activations: halve the HBM->VMEM DMA into the Pallas kernel.
    conv = conv.astype(jnp.bfloat16).reshape(n, hw, c)

    # Pad batch so every grid step gets a full BT-sample block (zero samples
    # are harmless: IN stats of zeros stay finite via eps; padded rows dropped).
    n_blocks = pl.cdiv(n, bt)
    n_pad = n_blocks * bt
    if n_pad != n:
        conv = jnp.pad(conv, ((0, n_pad - n), (0, 0), (0, 0)))

    # Consolidated per-channel parameter slab: (16, C) f32.
    g1, be1, mu1, v1 = params["ibn1"]
    g2, be2, mu2, v2 = params["ibn2"]
    p_rows = jnp.concatenate(
        [params["stem_b"], g1, be1, mu1, v1, params["b1"],
         g2, be2, mu2, v2, params["b2"],
         jnp.zeros((5, c), jnp.float32)], axis=0)                    # (16, C)
    w_stack = jnp.stack([params["w1"], params["w2"]]).astype(jnp.bfloat16)

    feat = pl.pallas_call(
        _backbone_block_kernel,
        out_shape=jax.ShapeDtypeStruct((n_pad, c), jnp.float32),
        grid=(n_blocks,),
        in_specs=[
            pl.BlockSpec((bt, hw, c), lambda i: (i, 0, 0)),          # activations
            pl.BlockSpec((16, c), lambda i: (0, 0)),                 # param slab
            pl.BlockSpec((2, c, c), lambda i: (0, 0, 0)),            # 1x1 weights
        ],
        out_specs=pl.BlockSpec((bt, c), lambda i: (i, 0)),
        compiler_params=pltpu.CompilerParams(
            dimension_semantics=("parallel",),
            vmem_limit_bytes=32 * 1024 * 1024),
    )(conv, p_rows, w_stack)

    return feat[:n]                                                  # (N, C)


if __name__ == "__main__":
    key = jax.random.PRNGKey(0)
    k_param, k_x = jax.random.split(key)
    C = 128                                   # lane-dense channel width
    N = 16                                    # BT=8 -> grid=(2,) (even, v7x-friendly)
    params = init_params(k_param, cin=3, c=C)
    x = jax.random.normal(k_x, (N, 3, 16, 16), jnp.float32)          # NCHW input

    fwd = jax.jit(net_ibn_forward)
    out = jax.block_until_ready(fwd(params, x))

    assert out.shape == (N, C), out.shape
    assert bool(jnp.all(jnp.isfinite(out)))
    print("KERNEL_OK")
</pallas_src>

<mosaic_0001>
module attributes {stable_mosaic.version = 11 : i64} {
  func.func @_backbone_block_kernel(%arg0: i32, %arg1: memref<8x64x128xbf16, #tpu.memory_space<vmem>>, %arg2: memref<16x128xf32, #tpu.memory_space<vmem>>, %arg3: memref<2x128x128xbf16, #tpu.memory_space<vmem>>, %arg4: memref<8x128xf32, #tpu.memory_space<vmem>>) attributes {dimension_semantics = [#tpu.dimension_semantics<parallel>], iteration_bounds = array<i64: 2>, scalar_prefetch = 0 : i64, scratch_operands = 0 : i64, tpu.core_type = #tpu.core_type<tc>, window_params = [{transform_indices = @transform_0, window_bounds = array<i64: 8, 64, 128>}, {pipeline_mode = #tpu.pipeline_mode<synchronous>, transform_indices = @transform_1, window_bounds = array<i64: 16, 128>}, {pipeline_mode = #tpu.pipeline_mode<synchronous>, transform_indices = @transform_2, window_bounds = array<i64: 2, 128, 128>}, {transform_indices = @transform_3, window_bounds = array<i64: 8, 128>}]} {
    %0 = tpu.iota {dimensions = array<i32: 2>} : vector<1x1x128xi32>
    %c64_i32 = arith.constant 64 : i32
    %1 = vector.broadcast %c64_i32 : i32 to vector<1x1x128xi32>
    %2 = arith.cmpi slt, %0, %1 : vector<1x1x128xi32>
    %c0 = arith.constant 0 : index
    %c0_0 = arith.constant 0 : index
    %c0_1 = arith.constant 0 : index
    %3 = vector.load %arg1[%c0, %c0_0, %c0_1] : memref<8x64x128xbf16, #tpu.memory_space<vmem>>, vector<8x64x128xbf16>
    %4 = arith.extf %3 : vector<8x64x128xbf16> to vector<8x64x128xf32>
    %c0_2 = arith.constant 0 : index
    %c0_3 = arith.constant 0 : index
    %5 = vector.load %arg2[%c0_2, %c0_3] : memref<16x128xf32, #tpu.memory_space<vmem>>, vector<1x128xf32>
    %6 = vector.shape_cast %5 : vector<1x128xf32> to vector<128xf32>
    %7 = vector.shape_cast %6 : vector<128xf32> to vector<1x1x128xf32>
    %8 = vector.broadcast %7 : vector<1x1x128xf32> to vector<8x64x128xf32>
    %9 = arith.addf %4, %8 : vector<8x64x128xf32>
    %c1 = arith.constant 1 : index
    %c0_4 = arith.constant 0 : index
    %10 = vector.load %arg2[%c1, %c0_4] : memref<16x128xf32, #tpu.memory_space<vmem>>, vector<1x128xf32>
    %11 = vector.shape_cast %10 : vector<1x128xf32> to vector<128xf32>
    %12 = vector.shape_cast %11 : vector<128xf32> to vector<1x1x128xf32>
    %c2 = arith.constant 2 : index
    %c0_5 = arith.constant 0 : index
    %13 = vector.load %arg2[%c2, %c0_5] : memref<16x128xf32, #tpu.memory_space<vmem>>, vector<1x128xf32>
    %14 = vector.shape_cast %13 : vector<1x128xf32> to vector<128xf32>
    %15 = vector.shape_cast %14 : vector<128xf32> to vector<1x1x128xf32>
    %c3 = arith.constant 3 : index
    %c0_6 = arith.constant 0 : index
    %16 = vector.load %arg2[%c3, %c0_6] : memref<16x128xf32, #tpu.memory_space<vmem>>, vector<1x128xf32>
    %17 = vector.shape_cast %16 : vector<1x128xf32> to vector<128xf32>
    %18 = vector.shape_cast %17 : vector<128xf32> to vector<1x1x128xf32>
    %c4 = arith.constant 4 : index
    %c0_7 = arith.constant 0 : index
    %19 = vector.load %arg2[%c4, %c0_7] : memref<16x128xf32, #tpu.memory_space<vmem>>, vector<1x128xf32>
    %20 = vector.shape_cast %19 : vector<1x128xf32> to vector<128xf32>
    %21 = vector.shape_cast %20 : vector<128xf32> to vector<1x1x128xf32>
    %cst = arith.constant dense<0.000000e+00> : vector<8x128xf32>
    %22 = vector.multi_reduction <add>, %9, %cst [1] : vector<8x64x128xf32> to vector<8x128xf32>
    %23 = vector.shape_cast %22 : vector<8x128xf32> to vector<8x1x128xf32>
    %cst_8 = arith.constant 6.400000e+01 : f32
    %24 = vector.broadcast %cst_8 : f32 to vector<8x1x128xf32>
    %25 = arith.divf %23, %24 : vector<8x1x128xf32>
    %26 = arith.mulf %9, %9 : vector<8x64x128xf32>
    %cst_9 = arith.constant dense<0.000000e+00> : vector<8x128xf32>
    %27 = vector.multi_reduction <add>, %26, %cst_9 [1] : vector<8x64x128xf32> to vector<8x128xf32>
    %28 = vector.shape_cast %27 : vector<8x128xf32> to vector<8x1x128xf32>
    %cst_10 = arith.constant 6.400000e+01 : f32
    %29 = vector.broadcast %cst_10 : f32 to vector<8x1x128xf32>
    %30 = arith.divf %28, %29 : vector<8x1x128xf32>
    %31 = arith.mulf %25, %25 : vector<8x1x128xf32>
    %32 = arith.subf %30, %31 : vector<8x1x128xf32>
    %33 = vector.shape_cast %2 : vector<1x1x128xi1> to vector<1x1x128xi1>
    %34 = vector.broadcast %33 : vector<1x1x128xi1> to vector<8x1x128xi1>
    %35 = vector.shape_cast %18 : vector<1x1x128xf32> to vector<1x1x128xf32>
    %36 = vector.broadcast %35 : vector<1x1x128xf32> to vector<8x1x128xf32>
    %37 = arith.select %34, %25, %36 : vector<8x1x128xi1>, vector<8x1x128xf32>
    %38 = vector.shape_cast %2 : vector<1x1x128xi1> to vector<1x1x128xi1>
    %39 = vector.broadcast %38 : vector<1x1x128xi1> to vector<8x1x128xi1>
    %40 = vector.shape_cast %21 : vector<1x1x128xf32> to vector<1x1x128xf32>
    %41 = vector.broadcast %40 : vector<1x1x128xf32> to vector<8x1x128xf32>
    %42 = arith.select %39, %32, %41 : vector<8x1x128xi1>, vector<8x1x128xf32>
    %cst_11 = arith.constant 9.99999974E-6 : f32
    %43 = vector.broadcast %cst_11 : f32 to vector<8x1x128xf32>
    %44 = arith.addf %42, %43 : vector<8x1x128xf32>
    %45 = math.rsqrt %44 : vector<8x1x128xf32>
    %46 = vector.broadcast %12 : vector<1x1x128xf32> to vector<8x1x128xf32>
    %47 = arith.mulf %46, %45 : vector<8x1x128xf32>
    %48 = arith.mulf %37, %47 : vector<8x1x128xf32>
    %49 = vector.broadcast %15 : vector<1x1x128xf32> to vector<8x1x128xf32>
    %50 = arith.subf %49, %48 : vector<8x1x128xf32>
    %51 = vector.broadcast %47 : vector<8x1x128xf32> to vector<8x64x128xf32>
    %52 = arith.mulf %9, %51 : vector<8x64x128xf32>
    %53 = vector.broadcast %50 : vector<8x1x128xf32> to vector<8x64x128xf32>
    %54 = arith.addf %52, %53 : vector<8x64x128xf32>
    %cst_12 = arith.constant 0.000000e+00 : f32
    %55 = vector.broadcast %cst_12 : f32 to vector<8x64x128xf32>
    %56 = arith.maximumf %54, %55 : vector<8x64x128xf32>
    %57 = vector.shape_cast %56 : vector<8x64x128xf32> to vector<512x128xf32>
    %58 = arith.truncf %57 : vector<512x128xf32> to vector<512x128xbf16>
    %c0_13 = arith.constant 0 : index
    %c0_14 = arith.constant 0 : index
    %c0_15 = arith.constant 0 : index
    %59 = vector.load %arg3[%c0_13, %c0_14, %c0_15] : memref<2x128x128xbf16, #tpu.memory_space<vmem>>, vector<1x128x128xbf16>
    %60 = vector.shape_cast %59 : vector<1x128x128xbf16> to vector<128x128xbf16>
    %cst_16 = arith.constant dense<0.000000e+00> : vector<512x128xf32>
    %61 = tpu.matmul %58, %60, %cst_16 {dimension_numbers = #tpu.dot_dimension_numbers<[1], [0], [0], [1], [0, 0, 1, 1], [], []>} : vector<512x128xbf16>, vector<128x128xbf16>, vector<512x128xf32> -> vector<512x128xf32>
    %62 = vector.shape_cast %61 : vector<512x128xf32> to vector<8x64x128xf32>
    %c5 = arith.constant 5 : index
    %c0_17 = arith.constant 0 : index
    %63 = vector.load %arg2[%c5, %c0_17] : memref<16x128xf32, #tpu.memory_space<vmem>>, vector<1x128xf32>
    %64 = vector.shape_cast %63 : vector<1x128xf32> to vector<128xf32>
    %65 = vector.shape_cast %64 : vector<128xf32> to vector<1x1x128xf32>
    %66 = vector.broadcast %65 : vector<1x1x128xf32> to vector<8x64x128xf32>
    %67 = arith.addf %62, %66 : vector<8x64x128xf32>
    %c6 = arith.constant 6 : index
    %c0_18 = arith.constant 0 : index
    %68 = vector.load %arg2[%c6, %c0_18] : memref<16x128xf32, #tpu.memory_space<vmem>>, vector<1x128xf32>
    %69 = vector.shape_cast %68 : vector<1x128xf32> to vector<128xf32>
    %70 = vector.shape_cast %69 : vector<128xf32> to vector<1x1x128xf32>
    %c7 = arith.constant 7 : index
    %c0_19 = arith.constant 0 : index
    %71 = vector.load %arg2[%c7, %c0_19] : memref<16x128xf32, #tpu.memory_space<vmem>>, vector<1x128xf32>
    %72 = vector.shape_cast %71 : vector<1x128xf32> to vector<128xf32>
    %73 = vector.shape_cast %72 : vector<128xf32> to vector<1x1x128xf32>
    %c8 = arith.constant 8 : index
    %c0_20 = arith.constant 0 : index
    %74 = vector.load %arg2[%c8, %c0_20] : memref<16x128xf32, #tpu.memory_space<vmem>>, vector<1x128xf32>
    %75 = vector.shape_cast %74 : vector<1x128xf32> to vector<128xf32>
    %76 = vector.shape_cast %75 : vector<128xf32> to vector<1x1x128xf32>
    %c9 = arith.constant 9 : index
    %c0_21 = arith.constant 0 : index
    %77 = vector.load %arg2[%c9, %c0_21] : memref<16x128xf32, #tpu.memory_space<vmem>>, vector<1x128xf32>
    %78 = vector.shape_cast %77 : vector<1x128xf32> to vector<128xf32>
    %79 = vector.shape_cast %78 : vector<128xf32> to vector<1x1x128xf32>
    %cst_22 = arith.constant dense<0.000000e+00> : vector<8x128xf32>
    %80 = vector.multi_reduction <add>, %67, %cst_22 [1] : vector<8x64x128xf32> to vector<8x128xf32>
    %81 = vector.shape_cast %80 : vector<8x128xf32> to vector<8x1x128xf32>
    %cst_23 = arith.constant 6.400000e+01 : f32
    %82 = vector.broadcast %cst_23 : f32 to vector<8x1x128xf32>
    %83 = arith.divf %81, %82 : vector<8x1x128xf32>
    %84 = arith.mulf %67, %67 : vector<8x64x128xf32>
    %cst_24 = arith.constant dense<0.000000e+00> : vector<8x128xf32>
    %85 = vector.multi_reduction <add>, %84, %cst_24 [1] : vector<8x64x128xf32> to vector<8x128xf32>
    %86 = vector.shape_cast %85 : vector<8x128xf32> to vector<8x1x128xf32>
    %cst_25 = arith.constant 6.400000e+01 : f32
    %87 = vector.broadcast %cst_25 : f32 to vector<8x1x128xf32>
    %88 = arith.divf %86, %87 : vector<8x1x128xf32>
    %89 = arith.mulf %83, %83 : vector<8x1x128xf32>
    %90 = arith.subf %88, %89 : vector<8x1x128xf32>
    %91 = vector.shape_cast %2 : vector<1x1x128xi1> to vector<1x1x128xi1>
    %92 = vector.broadcast %91 : vector<1x1x128xi1> to vector<8x1x128xi1>
    %93 = vector.shape_cast %76 : vector<1x1x128xf32> to vector<1x1x128xf32>
    %94 = vector.broadcast %93 : vector<1x1x128xf32> to vector<8x1x128xf32>
    %95 = arith.select %92, %83, %94 : vector<8x1x128xi1>, vector<8x1x128xf32>
    %96 = vector.shape_cast %2 : vector<1x1x128xi1> to vector<1x1x128xi1>
    %97 = vector.broadcast %96 : vector<1x1x128xi1> to vector<8x1x128xi1>
    %98 = vector.shape_cast %79 : vector<1x1x128xf32> to vector<1x1x128xf32>
    %99 = vector.broadcast %98 : vector<1x1x128xf32> to vector<8x1x128xf32>
    %100 = arith.select %97, %90, %99 : vector<8x1x128xi1>, vector<8x1x128xf32>
    %cst_26 = arith.constant 9.99999974E-6 : f32
    %101 = vector.broadcast %cst_26 : f32 to vector<8x1x128xf32>
    %102 = arith.addf %100, %101 : vector<8x1x128xf32>
    %103 = math.rsqrt %102 : vector<8x1x128xf32>
    %104 = vector.broadcast %70 : vector<1x1x128xf32> to vector<8x1x128xf32>
    %105 = arith.mulf %104, %103 : vector<8x1x128xf32>
    %106 = arith.mulf %95, %105 : vector<8x1x128xf32>
    %107 = vector.broadcast %73 : vector<1x1x128xf32> to vector<8x1x128xf32>
    %108 = arith.subf %107, %106 : vector<8x1x128xf32>
    %109 = vector.broadcast %105 : vector<8x1x128xf32> to vector<8x64x128xf32>
    %110 = arith.mulf %67, %109 : vector<8x64x128xf32>
    %111 = vector.broadcast %108 : vector<8x1x128xf32> to vector<8x64x128xf32>
    %112 = arith.addf %110, %111 : vector<8x64x128xf32>
    %cst_27 = arith.constant 0.000000e+00 : f32
    %113 = vector.broadcast %cst_27 : f32 to vector<8x64x128xf32>
    %114 = arith.maximumf %112, %113 : vector<8x64x128xf32>
    %115 = vector.shape_cast %114 : vector<8x64x128xf32> to vector<512x128xf32>
    %116 = arith.truncf %115 : vector<512x128xf32> to vector<512x128xbf16>
    %c1_28 = arith.constant 1 : index
    %c0_29 = arith.constant 0 : index
    %c0_30 = arith.constant 0 : index
    %117 = vector.load %arg3[%c1_28, %c0_29, %c0_30] : memref<2x128x128xbf16, #tpu.memory_space<vmem>>, vector<1x128x128xbf16>
    %118 = vector.shape_cast %117 : vector<1x128x128xbf16> to vector<128x128xbf16>
    %cst_31 = arith.constant dense<0.000000e+00> : vector<512x128xf32>
    %119 = tpu.matmul %116, %118, %cst_31 {dimension_numbers = #tpu.dot_dimension_numbers<[1], [0], [0], [1], [0, 0, 1, 1], [], []>} : vector<512x128xbf16>, vector<128x128xbf16>, vector<512x128xf32> -> vector<512x128xf32>
    %120 = vector.shape_cast %119 : vector<512x128xf32> to vector<8x64x128xf32>
    %c10 = arith.constant 10 : index
    %c0_32 = arith.constant 0 : index
    %121 = vector.load %arg2[%c10, %c0_32] : memref<16x128xf32, #tpu.memory_space<vmem>>, vector<1x128xf32>
    %122 = vector.shape_cast %121 : vector<1x128xf32> to vector<128xf32>
    %123 = vector.shape_cast %122 : vector<128xf32> to vector<1x1x128xf32>
    %124 = vector.broadcast %123 : vector<1x1x128xf32> to vector<8x64x128xf32>
    %125 = arith.addf %120, %124 : vector<8x64x128xf32>
    %126 = arith.addf %125, %56 : vector<8x64x128xf32>
    %cst_33 = arith.constant 0.000000e+00 : f32
    %127 = vector.broadcast %cst_33 : f32 to vector<8x64x128xf32>
    %128 = arith.maximumf %126, %127 : vector<8x64x128xf32>
    %cst_34 = arith.constant dense<0.000000e+00> : vector<8x128xf32>
    %129 = vector.multi_reduction <add>, %128, %cst_34 [1] : vector<8x64x128xf32> to vector<8x128xf32>
    %cst_35 = arith.constant 6.400000e+01 : f32
    %130 = vector.broadcast %cst_35 : f32 to vector<8x128xf32>
    %131 = arith.divf %129, %130 : vector<8x128xf32>
    %c0_36 = arith.constant 0 : index
    %c0_37 = arith.constant 0 : index
    %132 = vector.load %arg4[%c0_36, %c0_37] : memref<8x128xf32, #tpu.memory_space<vmem>>, vector<8x128xf32>
    tpu.vector_store %arg4[%c0_36, %c0_37], %131 {strides = array<i32>} : memref<8x128xf32, #tpu.memory_space<vmem>>, vector<8x128xf32>,
    return
  }
  func.func @transform_0(%arg0: i32) -> (i32, i32, i32) {
    %c0_i32 = arith.constant 0 : i32
    %c0_i32_0 = arith.constant 0 : i32
    %c0_i32_1 = arith.constant 0 : i32
    return %arg0, %c0_i32, %c0_i32_0 : i32, i32, i32
  }
  func.func @transform_1(%arg0: i32) -> (i32, i32) {
    %c0_i32 = arith.constant 0 : i32
    %c0_i32_0 = arith.constant 0 : i32
    %c0_i32_1 = arith.constant 0 : i32
    return %c0_i32, %c0_i32_0 : i32, i32
  }
  func.func @transform_2(%arg0: i32) -> (i32, i32, i32) {
    %c0_i32 = arith.constant 0 : i32
    %c0_i32_0 = arith.constant 0 : i32
    %c0_i32_1 = arith.constant 0 : i32
    %c0_i32_2 = arith.constant 0 : i32
    return %c0_i32, %c0_i32_0, %c0_i32_1 : i32, i32, i32
  }
  func.func @transform_3(%arg0: i32) -> (i32, i32) {
    %c0_i32 = arith.constant 0 : i32
    %c0_i32_0 = arith.constant 0 : i32
    return %arg0, %c0_i32 : i32, i32
  }
}

</mosaic_0001>

<llo_original>
// kernel: net_ibn_forward.1
$region0: #{net_ibn_forward.1}
  #allocation0 [shape = 'u32[]', space=smem, size = 0x4, offset = 0x4, fixed_abs, tag = 'smem constant byte address 0x4 - core index']
  #allocation1 [shape = 'u32[144,128]{1,0:T(1,128)}', space=vmem, size = 0x12000, scoped, tag = 'internal scratch']
  %s0 = inlined_call_operand.vmem [shape: bf16[16,64,128], index: 0, kind: input, shape index: {}]
  %s1 = inlined_call_operand.vmem [shape: f32[16,128], index: 1, kind: input, shape index: {}]
  %s2 = inlined_call_operand.vmem [shape: bf16[2,128,128], index: 2, kind: input, shape index: {}]
  %s3 = inlined_call_operand.hbm [shape: f32[16,128], index: 3, kind: output, shape index: {}]
  %s4 = sld [smem:[#allocation0]]
  $region45: #{net_ibn_forward.1} parent=0
    _
  %s6 = ssub.s32 1, %s4
  %s7 = scalar_select 0, %s6, %s4
  $region1: #{net_ibn_forward.1} parent=0
    #allocation2 [shape = 'u8[8192]{0}', space=vmem, size = 0x2000, scoped, tag = 'output window, operand 0']
    #allocation3 [shape = 's32[2]{0}', space=sflag, size = 0x8, scoped, tag = 'scoped memory for net_ibn_forward.1']
    %8 = vsyncpa [#allocation3], 0
    %s9 = scalar_lea.sflag [#allocation3], 1
    %10 = vsyncpa %s9, 0
    loop: start=0, step=1, limit=4
    $region2: #{net_ibn_forward.1} parent=1 // loop_pre_header
      _
    $region3: #{net_ibn_forward.1} parent=1 // loop_header
      %s12 = sphi 0, %s16
      %p13 = scmp.ge.s32.totalorder %s12, 4
      %s22 = sphi 0, %s24
      %s25 = sphi 0, %s22
      %s26 = sphi 0, %s25
      %s42 = sphi 0, %s26
      %s46 = sphi 0, %s46
      %s48 = sphi 0, %s46
      %s49 = sphi 0, %s48
      %s63 = sphi 0, %s49
      %s67 = sphi 0, %s67
      %s69 = sphi 0, %s67
      %s70 = sphi 0, %s69
      %s84 = sphi 0, %s70
      %s90 = sphi 0, %s92
      %s93 = sphi 0, %s90
      %s94 = sphi 0, %s93
      %s110 = sphi 0, %s94
    $region4: #{net_ibn_forward.1} parent=1 // loop_header_branch
      %15 = sbr.rel (%p13) target = $region8
    $region5: #{net_ibn_forward.1} parent=1 // loop_body
      %s17 = ssub.s32 %s12, 1
      %s18 = ssub.s32 %s12, 2
      %s19 = sadd.s32 %s12, 1
      %s20 = ssub.s32 %s12, %s19
      %p21 = scmp.eq.s32.totalorder %s20, 0
      %s23 = sadd.s32 %s22, 1
      %s24 = scalar_select %p21, %s22, %s23
      %p27 = pneg %p21
      %p28 = scmp.eq.s32.totalorder %s12, 1
      %p29 = por %p27, %p28
      %p30 = scmp.ne.s32.totalorder %s22, %s25
      %p31 = scmp.eq.s32.totalorder %s12, 0
      %p32 = por %p30, %p31
      %p33 = scmp.ne.s32.totalorder %s22, %s25
      %p34 = scmp.eq.s32.totalorder %s17, 1
      %p35 = por %p33, %p34
      %p36 = scmp.ne.s32.totalorder %s25, %s26
      %p37 = scmp.eq.s32.totalorder %s17, 0
      %p38 = por %p36, %p37
      %p39 = scmp.ne.s32.totalorder %s25, %s26
      %p40 = scmp.eq.s32.totalorder %s18, 1
      %p41 = por %p39, %p40
      %p43 = scmp.ne.s32.totalorder %s26, %s42
      %p44 = scmp.eq.s32.totalorder %s18, 0
      %p45 = por %p43, %p44
      %s47 = sadd.s32 %s46, 1
      %p50 = scmp.eq.s32.totalorder %s12, 1
      %p51 = scmp.ne.s32.totalorder %s46, %s48
      %p52 = scmp.eq.s32.totalorder %s12, 0
      %p53 = por %p51, %p52
      %p54 = scmp.ne.s32.totalorder %s46, %s48
      %p55 = scmp.eq.s32.totalorder %s17, 1
      %p56 = por %p54, %p55
      %p57 = scmp.ne.s32.totalorder %s48, %s49
      %p58 = scmp.eq.s32.totalorder %s17, 0
      %p59 = por %p57, %p58
      %p60 = scmp.ne.s32.totalorder %s48, %s49
      %p61 = scmp.eq.s32.totalorder %s18, 1
      %p62 = por %p60, %p61
      %p64 = scmp.ne.s32.totalorder %s49, %s63
      %p65 = scmp.eq.s32.totalorder %s18, 0
      %p66 = por %p64, %p65
      %s68 = sadd.s32 %s67, 1
      %p71 = scmp.eq.s32.totalorder %s12, 1
      %p72 = scmp.ne.s32.totalorder %s67, %s69
      %p73 = scmp.eq.s32.totalorder %s12, 0
      %p74 = por %p72, %p73
      %p75 = scmp.ne.s32.totalorder %s67, %s69
      %p76 = scmp.eq.s32.totalorder %s17, 1
      %p77 = por %p75, %p76
      %p78 = scmp.ne.s32.totalorder %s69, %s70
      %p79 = scmp.eq.s32.totalorder %s17, 0
      %p80 = por %p78, %p79
      %p81 = scmp.ne.s32.totalorder %s69, %s70
      %p82 = scmp.eq.s32.totalorder %s18, 1
      %p83 = por %p81, %p82
      %p85 = scmp.ne.s32.totalorder %s70, %s84
      %p86 = scmp.eq.s32.totalorder %s18, 0
      %p87 = por %p85, %p86
      %s88 = ssub.s32 %s12, %s19
      %p89 = scmp.eq.s32.totalorder %s88, 0
      %s91 = sadd.s32 %s90, 1
      %s92 = scalar_select %p89, %s90, %s91
      %p95 = pneg %p89
      %p96 = scmp.eq.s32.totalorder %s12, 1
      %p97 = por %p95, %p96
      %p98 = scmp.ne.s32.totalorder %s90, %s93
      %p99 = scmp.eq.s32.totalorder %s12, 0
      %p100 = por %p98, %p99
      %p101 = scmp.ne.s32.totalorder %s90, %s93
      %p102 = scmp.eq.s32.totalorder %s17, 1
      %p103 = por %p101, %p102
      %p104 = scmp.ne.s32.totalorder %s93, %s94
      %p105 = scmp.eq.s32.totalorder %s17, 0
      %p106 = por %p104, %p105
      %p107 = scmp.ne.s32.totalorder %s93, %s94
      %p108 = scmp.eq.s32.totalorder %s18, 1
      %p109 = por %p107, %p108
      %p111 = scmp.ne.s32.totalorder %s94, %s110
      %p112 = scmp.eq.s32.totalorder %s18, 0
      %p113 = por %p111, %p112
      %p114 = scmp.le.s32.totalorder 1, %s12
      %p115 = scmp.lt.s32.totalorder %s12, 3
      %p116 = pnand %p114, %p115
      %p117 = pneg %p116
      // Predicated region
      $region9: #{net_ibn_forward.1} parent=5 // pred_check
        _
      $region10: #{net_ibn_forward.1} parent=5 // pred_check_branch
        %119 = sbr.rel (%p116) target = $region12
      $region11: #{net_ibn_forward.1} parent=5 // pred_region
        %s120 = ssub.s32 %s12, 1
        // Predicated region
        $region13: #{net_ibn_forward.1} parent=11 // pred_check
          %p121 = pneg %p59
        $region14: #{net_ibn_forward.1} parent=11 // pred_check_branch
          %123 = sbr.rel (%p121) target = $region16
        $region15: #{net_ibn_forward.1} parent=11 // pred_region
          _
        $region16: #{net_ibn_forward.1} parent=11 // pred_fallthru
          _
        // Predicated region
        $region17: #{net_ibn_forward.1} parent=11 // pred_check
          %p124 = pneg %p80
        $region18: #{net_ibn_forward.1} parent=11 // pred_check_branch
          %126 = sbr.rel (%p124) target = $region20
        $region19: #{net_ibn_forward.1} parent=11 // pred_region
          _
        $region20: #{net_ibn_forward.1} parent=11 // pred_fallthru
          _
      $region12: #{net_ibn_forward.1} parent=5 // pred_fallthru
        _
      %p127 = scmp.lt.s32.totalorder %s12, 2
      // Predicated region
      $region21: #{net_ibn_forward.1} parent=5 // pred_check
        %p128 = pneg %p127
      $region22: #{net_ibn_forward.1} parent=5 // pred_check_branch
        %130 = sbr.rel (%p128) target = $region24
      $region23: #{net_ibn_forward.1} parent=5 // pred_region
        // Predicated region
        $region25: #{net_ibn_forward.1} parent=23 // pred_check
          %p131 = pneg %p32
        $region26: #{net_ibn_forward.1} parent=23 // pred_check_branch
          %133 = sbr.rel (%p131) target = $region28
        $region27: #{net_ibn_forward.1} parent=23 // pred_region
          %s134 = smul.u32 8, %s12
          %p135 = scmp.lt.s32.totalorder %s134, 15
          %s136 = scalar_select %p135, %s134, 15
          %s137 = smul.addr %s136, 8
          %s138 = smul.addr %s137, 4
          %s139 = scalar_lea.vmem %s0, %s138
          %s140 = smul.u32 8, %s12
        $region28: #{net_ibn_forward.1} parent=23 // pred_fallthru
          _
      $region24: #{net_ibn_forward.1} parent=5 // pred_fallthru
        _
      %p141 = scmp.le.s32.totalorder 1, %s12
      %p142 = scmp.lt.s32.totalorder %s12, 3
      %p143 = pnand %p141, %p142
      %p144 = pneg %p143
      // Predicated region
      $region29: #{net_ibn_forward.1} parent=5 // pred_check
        _
      $region30: #{net_ibn_forward.1} parent=5 // pred_check_branch
        %146 = sbr.rel (%p143) target = $region32
      $region31: #{net_ibn_forward.1} parent=5 // pred_region
        %s147 = ssub.s32 %s12, 1
        %s148 = smul.u32 8, %s17
        %p149 = scmp.lt.s32.totalorder %s148, 15
        %s150 = scalar_select %p149, %s148, 15
        %s151 = smul.addr %s150, 8
        %s152 = smul.addr %s151, 4
        %s153 = scalar_lea.vmem %s0, %s152
        %p154 = pneg %p38
        %p155 = pneg %p35
        %p156 = pneg %p59
        %p157 = pneg %p56
        %p158 = pneg %p80
        %p159 = pneg %p77
        %p160 = pneg %p106
        %p161 = pneg %p103
        %s162 = sand.u32 %s93, 1
        %s163 = scalar_lea.sflag [#allocation3], %s162
        %s164 = sand.u32 %s93, 1
        %s165 = smul.addr %s164, 8
        %s166 = scalar_lea.vmem [#allocation2], %s165
        %s167 = smul.u32 8, %s17
        %p168 = scmp.lt.s32.totalorder %s167, 15
        %s169 = scalar_select %p168, %s167, 15
        %s170 = smul.addr %s169, 8
        %s171 = smul.addr %s170, 4
        %s172 = scalar_lea.vmem %s0, %s171
        %s173 = smul.u32 8, %s17
        %v175 = vlaneseq
        %v176 = vand.u32 %v175, 127
        %vm177 = vcmp.lt.s32.totalorder %v176, 64
        %v178 = vld [vmem:[%s172] sm:$0xf]
        %v179 = vld [vmem:[%s172 + $0x4] sm:$0xf]
        %v180 = vld [vmem:[%s172 + $0x8] sm:$0xf]
        %v181 = vld [vmem:[%s172 + $0xc] sm:$0xf]
        %v182 = vld [vmem:[%s172 + $0x10] sm:$0xf]
        %v183 = vld [vmem:[%s172 + $0x14] sm:$0xf]
        %v184 = vld [vmem:[%s172 + $0x18] sm:$0xf]
        %v185 = vld [vmem:[%s172 + $0x1c] sm:$0xf]
        %v186 = vld [vmem:[%s172 + $0x20] sm:$0xf]
        %v187 = vld [vmem:[%s172 + $0x24] sm:$0xf]
        %v188 = vld [vmem:[%s172 + $0x28] sm:$0xf]
        %v189 = vld [vmem:[%s172 + $0x2c] sm:$0xf]
        %v190 = vld [vmem:[%s172 + $0x30] sm:$0xf]
        %v191 = vld [vmem:[%s172 + $0x34] sm:$0xf]
        %v192 = vld [vmem:[%s172 + $0x38] sm:$0xf]
        %v193 = vld [vmem:[%s172 + $0x3c] sm:$0xf]
        %v194 = vld [vmem:[%s172 + $0x40] sm:$0xf]
        %v195 = vld [vmem:[%s172 + $0x44] sm:$0xf]
        %v196 = vld [vmem:[%s172 + $0x48] sm:$0xf]
        %v197 = vld [vmem:[%s172 + $0x4c] sm:$0xf]
        %v198 = vld [vmem:[%s172 + $0x50] sm:$0xf]
        %v199 = vld [vmem:[%s172 + $0x54] sm:$0xf]
        %v200 = vld [vmem:[%s172 + $0x58] sm:$0xf]
        %v201 = vld [vmem:[%s172 + $0x5c] sm:$0xf]
        %v202 = vld [vmem:[%s172 + $0x60] sm:$0xf]
        %v203 = vld [vmem:[%s172 + $0x64] sm:$0xf]
        %v204 = vld [vmem:[%s172 + $0x68] sm:$0xf]
        %v205 = vld [vmem:[%s172 + $0x6c] sm:$0xf]
        %v206 = vld [vmem:[%s172 + $0x70] sm:$0xf]
        %v207 = vld [vmem:[%s172 + $0x74] sm:$0xf]
        %v208 = vld [vmem:[%s172 + $0x78] sm:$0xf]
        %v209 = vld [vmem:[%s172 + $0x7c] sm:$0xf]
        %v210 = vld [vmem:[%s172 + $0x80] sm:$0xf]
        %v211 = vld [vmem:[%s172 + $0x84] sm:$0xf]
        %v212 = vld [vmem:[%s172 + $0x88] sm:$0xf]
        %v213 = vld [vmem:[%s172 + $0x8c] sm:$0xf]
        %v214 = vld [vmem:[%s172 + $0x90] sm:$0xf]
        %v215 = vld [vmem:[%s172 + $0x94] sm:$0xf]
        %v216 = vld [vmem:[%s172 + $0x98] sm:$0xf]
        %v217 = vld [vmem:[%s172 + $0x9c] sm:$0xf]
        %v218 = vld [vmem:[%s172 + $0xa0] sm:$0xf]
        %v219 = vld [vmem:[%s172 + $0xa4] sm:$0xf]
        %v220 = vld [vmem:[%s172 + $0xa8] sm:$0xf]
        %v221 = vld [vmem:[%s172 + $0xac] sm:$0xf]
        %v222 = vld [vmem:[%s172 + $0xb0] sm:$0xf]
        %v223 = vld [vmem:[%s172 + $0xb4] sm:$0xf]
        %v224 = vld [vmem:[%s172 + $0xb8] sm:$0xf]
        %v225 = vld [vmem:[%s172 + $0xbc] sm:$0xf]
        %v226 = vld [vmem:[%s172 + $0xc0] sm:$0xf]
        %v227 = vld [vmem:[%s172 + $0xc4] sm:$0xf]
        %v228 = vld [vmem:[%s172 + $0xc8] sm:$0xf]
        %v229 = vld [vmem:[%s172 + $0xcc] sm:$0xf]
        %v230 = vld [vmem:[%s172 + $0xd0] sm:$0xf]
        %v231 = vld [vmem:[%s172 + $0xd4] sm:$0xf]
        %v232 = vld [vmem:[%s172 + $0xd8] sm:$0xf]
        %v233 = vld [vmem:[%s172 + $0xdc] sm:$0xf]
        %v234 = vld [vmem:[%s172 + $0xe0] sm:$0xf]
        %v235 = vld [vmem:[%s172 + $0xe4] sm:$0xf]
        %v236 = vld [vmem:[%s172 + $0xe8] sm:$0xf]
        %v237 = vld [vmem:[%s172 + $0xec] sm:$0xf]
        %v238 = vld [vmem:[%s172 + $0xf0] sm:$0xf]
        %v239 = vld [vmem:[%s172 + $0xf4] sm:$0xf]
        %v240 = vld [vmem:[%s172 + $0xf8] sm:$0xf]
        %v241 = vld [vmem:[%s172 + $0xfc] sm:$0xf]
        %v242 = vunpack.c.l.bf16 %v178
        %v243 = vunpack.c.l.bf16 %v179
        %v244 = vunpack.c.l.bf16 %v180
        %v245 = vunpack.c.l.bf16 %v181
        %v246 = vunpack.c.l.bf16 %v182
        %v247 = vunpack.c.l.bf16 %v183
        %v248 = vunpack.c.l.bf16 %v184
        %v249 = vunpack.c.l.bf16 %v185
        %v250 = vunpack.c.l.bf16 %v186
        %v251 = vunpack.c.l.bf16 %v187
        %v252 = vunpack.c.l.bf16 %v188
        %v253 = vunpack.c.l.bf16 %v189
        %v254 = vunpack.c.l.bf16 %v190
        %v255 = vunpack.c.l.bf16 %v191
        %v256 = vunpack.c.l.bf16 %v192
        %v257 = vunpack.c.l.bf16 %v193
        %v258 = vunpack.c.l.bf16 %v194
        %v259 = vunpack.c.l.bf16 %v195
        %v260 = vunpack.c.l.bf16 %v196
        %v261 = vunpack.c.l.bf16 %v197
        %v262 = vunpack.c.l.bf16 %v198
        %v263 = vunpack.c.l.bf16 %v199
        %v264 = vunpack.c.l.bf16 %v200
        %v265 = vunpack.c.l.bf16 %v201
        %v266 = vunpack.c.l.bf16 %v202
        %v267 = vunpack.c.l.bf16 %v203
        %v268 = vunpack.c.l.bf16 %v204
        %v269 = vunpack.c.l.bf16 %v205
        %v270 = vunpack.c.l.bf16 %v206
        %v271 = vunpack.c.l.bf16 %v207
        %v272 = vunpack.c.l.bf16 %v208
        %v273 = vunpack.c.l.bf16 %v209
        %v274 = vunpack.c.l.bf16 %v210
        %v275 = vunpack.c.l.bf16 %v211
        %v276 = vunpack.c.l.bf16 %v212
        %v277 = vunpack.c.l.bf16 %v213
        %v278 = vunpack.c.l.bf16 %v214
        %v279 = vunpack.c.l.bf16 %v215
        %v280 = vunpack.c.l.bf16 %v216
        %v281 = vunpack.c.l.bf16 %v217
        %v282 = vunpack.c.l.bf16 %v218
        %v283 = vunpack.c.l.bf16 %v219
        %v284 = vunpack.c.l.bf16 %v220
        %v285 = vunpack.c.l.bf16 %v221
        %v286 = vunpack.c.l.bf16 %v222
        %v287 = vunpack.c.l.bf16 %v223
        %v288 = vunpack.c.l.bf16 %v224
        %v289 = vunpack.c.l.bf16 %v225
        %v290 = vunpack.c.l.bf16 %v226
        %v291 = vunpack.c.l.bf16 %v227
        %v292 = vunpack.c.l.bf16 %v228
        %v293 = vunpack.c.l.bf16 %v229
        %v294 = vunpack.c.l.bf16 %v230
        %v295 = vunpack.c.l.bf16 %v231
        %v296 = vunpack.c.l.bf16 %v232
        %v297 = vunpack.c.l.bf16 %v233
        %v298 = vunpack.c.l.bf16 %v234
        %v299 = vunpack.c.l.bf16 %v235
        %v300 = vunpack.c.l.bf16 %v236
        %v301 = vunpack.c.l.bf16 %v237
        %v302 = vunpack.c.l.bf16 %v238
        %v303 = vunpack.c.l.bf16 %v239
        %v304 = vunpack.c.l.bf16 %v240
        %v305 = vunpack.c.l.bf16 %v241
        %v306 = vld [vmem:[%s1] sm:$0x1]
        %v307 = vlaneseq
        %v308 = vshrl.u32 %v307, 7
        %v309 = vsub.s32 0, %v308
        %v310 = vrot.slane %v306, %v309
        %v311 = vadd.f32 %v242, %v310
        %v312 = vadd.f32 %v243, %v310
        %v313 = vadd.f32 %v244, %v310
        %v314 = vadd.f32 %v245, %v310
        %v315 = vadd.f32 %v246, %v310
        %v316 = vadd.f32 %v247, %v310
        %v317 = vadd.f32 %v248, %v310
        %v318 = vadd.f32 %v249, %v310
        %v319 = vadd.f32 %v250, %v310
        %v320 = vadd.f32 %v251, %v310
        %v321 = vadd.f32 %v252, %v310
        %v322 = vadd.f32 %v253, %v310
        %v323 = vadd.f32 %v254, %v310
        %v324 = vadd.f32 %v255, %v310
        %v325 = vadd.f32 %v256, %v310
        %v326 = vadd.f32 %v257, %v310
        %v327 = vadd.f32 %v258, %v310
        %v328 = vadd.f32 %v259, %v310
        %v329 = vadd.f32 %v260, %v310
        %v330 = vadd.f32 %v261, %v310
        %v331 = vadd.f32 %v262, %v310
        %v332 = vadd.f32 %v263, %v310
        %v333 = vadd.f32 %v264, %v310
        %v334 = vadd.f32 %v265, %v310
        %v335 = vadd.f32 %v266, %v310
        %v336 = vadd.f32 %v267, %v310
        %v337 = vadd.f32 %v268, %v310
        %v338 = vadd.f32 %v269, %v310
        %v339 = vadd.f32 %v270, %v310
        %v340 = vadd.f32 %v271, %v310
        %v341 = vadd.f32 %v272, %v310
        %v342 = vadd.f32 %v273, %v310
        %v343 = vadd.f32 %v274, %v310
        %v344 = vadd.f32 %v275, %v310
        %v345 = vadd.f32 %v276, %v310
        %v346 = vadd.f32 %v277, %v310
        %v347 = vadd.f32 %v278, %v310
        %v348 = vadd.f32 %v279, %v310
        %v349 = vadd.f32 %v280, %v310
        %v350 = vadd.f32 %v281, %v310
        %v351 = vadd.f32 %v282, %v310
        %v352 = vadd.f32 %v283, %v310
        %v353 = vadd.f32 %v284, %v310
        %v354 = vadd.f32 %v285, %v310
        %v355 = vadd.f32 %v286, %v310
        %v356 = vadd.f32 %v287, %v310
        %v357 = vadd.f32 %v288, %v310
        %v358 = vadd.f32 %v289, %v310
        %v359 = vadd.f32 %v290, %v310
        %v360 = vadd.f32 %v291, %v310
        %v361 = vadd.f32 %v292, %v310
        %v362 = vadd.f32 %v293, %v310
        %v363 = vadd.f32 %v294, %v310
        %v364 = vadd.f32 %v295, %v310
        %v365 = vadd.f32 %v296, %v310
        %v366 = vadd.f32 %v297, %v310
        %v367 = vadd.f32 %v298, %v310
        %v368 = vadd.f32 %v299, %v310
        %v369 = vadd.f32 %v300, %v310
        %v370 = vadd.f32 %v301, %v310
        %v371 = vadd.f32 %v302, %v310
        %v372 = vadd.f32 %v303, %v310
        %v373 = vadd.f32 %v304, %v310
        %v374 = vadd.f32 %v305, %v310
        %v375 = vld [vmem:[%s1 + $0x1] sm:$0x1]
        %v376 = vld [vmem:[%s1 + $0x2] sm:$0x1]
        %v377 = vld [vmem:[%s1 + $0x3] sm:$0x1]
        %v378 = vld [vmem:[%s1 + $0x4] sm:$0x1]
        %v379 = vadd.f32 %v311, %v312
        %v380 = vadd.f32 %v379, %v313
        %v381 = vadd.f32 %v380, %v314
        %v382 = vadd.f32 %v381, %v315
        %v383 = vadd.f32 %v382, %v316
        %v384 = vadd.f32 %v383, %v317
        %v385 = vadd.f32 %v384, %v318
        %v386 = vrot.slane %v385, 4
        %v387 = vadd.f32 %v385, %v386
        %v388 = vrot.slane %v387, 2
        %v389 = vadd.f32 %v387, %v388
        %v390 = vrot.slane %v389, 1
        %v391 = vadd.f32 %v389, %v390
        %v392 = vadd.f32 %v319, %v320
        %v393 = vadd.f32 %v392, %v321
        %v394 = vadd.f32 %v393, %v322
        %v395 = vadd.f32 %v394, %v323
        %v396 = vadd.f32 %v395, %v324
        %v397 = vadd.f32 %v396, %v325
        %v398 = vadd.f32 %v397, %v326
        %v399 = vrot.slane %v398, 4
        %v400 = vadd.f32 %v398, %v399
        %v401 = vrot.slane %v400, 2
        %v402 = vadd.f32 %v400, %v401
        %v403 = vrot.slane %v402, 1
        %v404 = vadd.f32 %v402, %v403
        %v405 = vadd.f32 %v327, %v328
        %v406 = vadd.f32 %v405, %v329
        %v407 = vadd.f32 %v406, %v330
        %v408 = vadd.f32 %v407, %v331
        %v409 = vadd.f32 %v408, %v332
        %v410 = vadd.f32 %v409, %v333
        %v411 = vadd.f32 %v410, %v334
        %v412 = vrot.slane %v411, 4
        %v413 = vadd.f32 %v411, %v412
        %v414 = vrot.slane %v413, 2
        %v415 = vadd.f32 %v413, %v414
        %v416 = vrot.slane %v415, 1
        %v417 = vadd.f32 %v415, %v416
        %v418 = vadd.f32 %v335, %v336
        %v419 = vadd.f32 %v418, %v337
        %v420 = vadd.f32 %v419, %v338
        %v421 = vadd.f32 %v420, %v339
        %v422 = vadd.f32 %v421, %v340
        %v423 = vadd.f32 %v422, %v341
        %v424 = vadd.f32 %v423, %v342
        %v425 = vrot.slane %v424, 4
        %v426 = vadd.f32 %v424, %v425
        %v427 = vrot.slane %v426, 2
        %v428 = vadd.f32 %v426, %v427
        %v429 = vrot.slane %v428, 1
        %v430 = vadd.f32 %v428, %v429
        %v431 = vadd.f32 %v343, %v344
        %v432 = vadd.f32 %v431, %v345
        %v433 = vadd.f32 %v432, %v346
        %v434 = vadd.f32 %v433, %v347
        %v435 = vadd.f32 %v434, %v348
        %v436 = vadd.f32 %v435, %v349
        %v437 = vadd.f32 %v436, %v350
        %v438 = vrot.slane %v437, 4
        %v439 = vadd.f32 %v437, %v438
        %v440 = vrot.slane %v439, 2
        %v441 = vadd.f32 %v439, %v440
        %v442 = vrot.slane %v441, 1
        %v443 = vadd.f32 %v441, %v442
        %v444 = vadd.f32 %v351, %v352
        %v445 = vadd.f32 %v444, %v353
        %v446 = vadd.f32 %v445, %v354
        %v447 = vadd.f32 %v446, %v355
        %v448 = vadd.f32 %v447, %v356
        %v449 = vadd.f32 %v448, %v357
        %v450 = vadd.f32 %v449, %v358
        %v451 = vrot.slane %v450, 4
        %v452 = vadd.f32 %v450, %v451
        %v453 = vrot.slane %v452, 2
        %v454 = vadd.f32 %v452, %v453
        %v455 = vrot.slane %v454, 1
        %v456 = vadd.f32 %v454, %v455
        %v457 = vadd.f32 %v359, %v360
        %v458 = vadd.f32 %v457, %v361
        %v459 = vadd.f32 %v458, %v362
        %v460 = vadd.f32 %v459, %v363
        %v461 = vadd.f32 %v460, %v364
        %v462 = vadd.f32 %v461, %v365
        %v463 = vadd.f32 %v462, %v366
        %v464 = vrot.slane %v463, 4
        %v465 = vadd.f32 %v463, %v464
        %v466 = vrot.slane %v465, 2
        %v467 = vadd.f32 %v465, %v466
        %v468 = vrot.slane %v467, 1
        %v469 = vadd.f32 %v467, %v468
        %v470 = vadd.f32 %v367, %v368
        %v471 = vadd.f32 %v470, %v369
        %v472 = vadd.f32 %v471, %v370
        %v473 = vadd.f32 %v472, %v371
        %v474 = vadd.f32 %v473, %v372
        %v475 = vadd.f32 %v474, %v373
        %v476 = vadd.f32 %v475, %v374
        %v477 = vrot.slane %v476, 4
        %v478 = vadd.f32 %v476, %v477
        %v479 = vrot.slane %v478, 2
        %v480 = vadd.f32 %v478, %v479
        %v481 = vrot.slane %v480, 1
        %v482 = vadd.f32 %v480, %v481
        %v483 = vrcp.pop 64.0
        %v484 = vmul.f32 %v391, %v483
        %v485 = vmul.f32 %v404, %v483
        %v486 = vmul.f32 %v417, %v483
        %v487 = vmul.f32 %v430, %v483
        %v488 = vmul.f32 %v443, %v483
        %v489 = vmul.f32 %v456, %v483
        %v490 = vmul.f32 %v469, %v483
        %v491 = vmul.f32 %v482, %v483
        %v492 = vmul.f32 %v311, %v311
        %v493 = vmul.f32 %v312, %v312
        %v494 = vmul.f32 %v313, %v313
        %v495 = vmul.f32 %v314, %v314
        %v496 = vmul.f32 %v315, %v315
        %v497 = vmul.f32 %v316, %v316
        %v498 = vmul.f32 %v317, %v317
        %v499 = vmul.f32 %v318, %v318
        %v500 = vmul.f32 %v319, %v319
        %v501 = vmul.f32 %v320, %v320
        %v502 = vmul.f32 %v321, %v321
        %v503 = vmul.f32 %v322, %v322
        %v504 = vmul.f32 %v323, %v323
        %v505 = vmul.f32 %v324, %v324
        %v506 = vmul.f32 %v325, %v325
        %v507 = vmul.f32 %v326, %v326
        %v508 = vmul.f32 %v327, %v327
        %v509 = vmul.f32 %v328, %v328
        %v510 = vmul.f32 %v329, %v329
        %v511 = vmul.f32 %v330, %v330
        %v512 = vmul.f32 %v331, %v331
        %v513 = vmul.f32 %v332, %v332
        %v514 = vmul.f32 %v333, %v333
        %v515 = vmul.f32 %v334, %v334
        %v516 = vmul.f32 %v335, %v335
        %v517 = vmul.f32 %v336, %v336
        %v518 = vmul.f32 %v337, %v337
        %v519 = vmul.f32 %v338, %v338
        %v520 = vmul.f32 %v339, %v339
        %v521 = vmul.f32 %v340, %v340
        %v522 = vmul.f32 %v341, %v341
        %v523 = vmul.f32 %v342, %v342
        %v524 = vmul.f32 %v343, %v343
        %v525 = vmul.f32 %v344, %v344
        %v526 = vmul.f32 %v345, %v345
        %v527 = vmul.f32 %v346, %v346
        %v528 = vmul.f32 %v347, %v347
        %v529 = vmul.f32 %v348, %v348
        %v530 = vmul.f32 %v349, %v349
        %v531 = vmul.f32 %v350, %v350
        %v532 = vmul.f32 %v351, %v351
        %v533 = vmul.f32 %v352, %v352
        %v534 = vmul.f32 %v353, %v353
        %v535 = vmul.f32 %v354, %v354
        %v536 = vmul.f32 %v355, %v355
        %v537 = vmul.f32 %v356, %v356
        %v538 = vmul.f32 %v357, %v357
        %v539 = vmul.f32 %v358, %v358
        %v540 = vmul.f32 %v359, %v359
        %v541 = vmul.f32 %v360, %v360
        %v542 = vmul.f32 %v361, %v361
        %v543 = vmul.f32 %v362, %v362
        %v544 = vmul.f32 %v363, %v363
        %v545 = vmul.f32 %v364, %v364
        %v546 = vmul.f32 %v365, %v365
        %v547 = vmul.f32 %v366, %v366
        %v548 = vmul.f32 %v367, %v367
        %v549 = vmul.f32 %v368, %v368
        %v550 = vmul.f32 %v369, %v369
        %v551 = vmul.f32 %v370, %v370
        %v552 = vmul.f32 %v371, %v371
        %v553 = vmul.f32 %v372, %v372
        %v554 = vmul.f32 %v373, %v373
        %v555 = vmul.f32 %v374, %v374
        %v556 = vadd.f32 %v492, %v493
        %v557 = vadd.f32 %v556, %v494
        %v558 = vadd.f32 %v557, %v495
        %v559 = vadd.f32 %v558, %v496
        %v560 = vadd.f32 %v559, %v497
        %v561 = vadd.f32 %v560, %v498
        %v562 = vadd.f32 %v561, %v499
        %v563 = vrot.slane %v562, 4
        %v564 = vadd.f32 %v562, %v563
        %v565 = vrot.slane %v564, 2
        %v566 = vadd.f32 %v564, %v565
        %v567 = vrot.slane %v566, 1
        %v568 = vadd.f32 %v566, %v567
        %v569 = vadd.f32 %v500, %v501
        %v570 = vadd.f32 %v569, %v502
        %v571 = vadd.f32 %v570, %v503
        %v572 = vadd.f32 %v571, %v504
        %v573 = vadd.f32 %v572, %v505
        %v574 = vadd.f32 %v573, %v506
        %v575 = vadd.f32 %v574, %v507
        %v576 = vrot.slane %v575, 4
        %v577 = vadd.f32 %v575, %v576
        %v578 = vrot.slane %v577, 2
        %v579 = vadd.f32 %v577, %v578
        %v580 = vrot.slane %v579, 1
        %v581 = vadd.f32 %v579, %v580
        %v582 = vadd.f32 %v508, %v509
        %v583 = vadd.f32 %v582, %v510
        %v584 = vadd.f32 %v583, %v511
        %v585 = vadd.f32 %v584, %v512
        %v586 = vadd.f32 %v585, %v513
        %v587 = vadd.f32 %v586, %v514
        %v588 = vadd.f32 %v587, %v515
        %v589 = vrot.slane %v588, 4
        %v590 = vadd.f32 %v588, %v589
        %v591 = vrot.slane %v590, 2
        %v592 = vadd.f32 %v590, %v591
        %v593 = vrot.slane %v592, 1
        %v594 = vadd.f32 %v592, %v593
        %v595 = vadd.f32 %v516, %v517
        %v596 = vadd.f32 %v595, %v518
        %v597 = vadd.f32 %v596, %v519
        %v598 = vadd.f32 %v597, %v520
        %v599 = vadd.f32 %v598, %v521
        %v600 = vadd.f32 %v599, %v522
        %v601 = vadd.f32 %v600, %v523
        %v602 = vrot.slane %v601, 4
        %v603 = vadd.f32 %v601, %v602
        %v604 = vrot.slane %v603, 2
        %v605 = vadd.f32 %v603, %v604
        %v606 = vrot.slane %v605, 1
        %v607 = vadd.f32 %v605, %v606
        %v608 = vadd.f32 %v524, %v525
        %v609 = vadd.f32 %v608, %v526
        %v610 = vadd.f32 %v609, %v527
        %v611 = vadd.f32 %v610, %v528
        %v612 = vadd.f32 %v611, %v529
        %v613 = vadd.f32 %v612, %v530
        %v614 = vadd.f32 %v613, %v531
        %v615 = vrot.slane %v614, 4
        %v616 = vadd.f32 %v614, %v615
        %v617 = vrot.slane %v616, 2
        %v618 = vadd.f32 %v616, %v617
        %v619 = vrot.slane %v618, 1
        %v620 = vadd.f32 %v618, %v619
        %v621 = vadd.f32 %v532, %v533
        %v622 = vadd.f32 %v621, %v534
        %v623 = vadd.f32 %v622, %v535
        %v624 = vadd.f32 %v623, %v536
        %v625 = vadd.f32 %v624, %v537
        %v626 = vadd.f32 %v625, %v538
        %v627 = vadd.f32 %v626, %v539
        %v628 = vrot.slane %v627, 4
        %v629 = vadd.f32 %v627, %v628
        %v630 = vrot.slane %v629, 2
        %v631 = vadd.f32 %v629, %v630
        %v632 = vrot.slane %v631, 1
        %v633 = vadd.f32 %v631, %v632
        %v634 = vadd.f32 %v540, %v541
        %v635 = vadd.f32 %v634, %v542
        %v636 = vadd.f32 %v635, %v543
        %v637 = vadd.f32 %v636, %v544
        %v638 = vadd.f32 %v637, %v545
        %v639 = vadd.f32 %v638, %v546
        %v640 = vadd.f32 %v639, %v547
        %v641 = vrot.slane %v640, 4
        %v642 = vadd.f32 %v640, %v641
        %v643 = vrot.slane %v642, 2
        %v644 = vadd.f32 %v642, %v643
        %v645 = vrot.slane %v644, 1
        %v646 = vadd.f32 %v644, %v645
        %v647 = vadd.f32 %v548, %v549
        %v648 = vadd.f32 %v647, %v550
        %v649 = vadd.f32 %v648, %v551
        %v650 = vadd.f32 %v649, %v552
        %v651 = vadd.f32 %v650, %v553
        %v652 = vadd.f32 %v651, %v554
        %v653 = vadd.f32 %v652, %v555
        %v654 = vrot.slane %v653, 4
        %v655 = vadd.f32 %v653, %v654
        %v656 = vrot.slane %v655, 2
        %v657 = vadd.f32 %v655, %v656
        %v658 = vrot.slane %v657, 1
        %v659 = vadd.f32 %v657, %v658
        %v660 = vmul.f32 %v568, %v483
        %v661 = vmul.f32 %v581, %v483
        %v662 = vmul.f32 %v594, %v483
        %v663 = vmul.f32 %v607, %v483
        %v664 = vmul.f32 %v620, %v483
        %v665 = vmul.f32 %v633, %v483
        %v666 = vmul.f32 %v646, %v483
        %v667 = vmul.f32 %v659, %v483
        %v668 = vmul.f32 %v484, %v484
        %v669 = vmul.f32 %v485, %v485
        %v670 = vmul.f32 %v486, %v486
        %v671 = vmul.f32 %v487, %v487
        %v672 = vmul.f32 %v488, %v488
        %v673 = vmul.f32 %v489, %v489
        %v674 = vmul.f32 %v490, %v490
        %v675 = vmul.f32 %v491, %v491
        %v676 = vsub.f32 %v660, %v668
        %v677 = vsub.f32 %v661, %v669
        %v678 = vsub.f32 %v662, %v670
        %v679 = vsub.f32 %v663, %v671
        %v680 = vsub.f32 %v664, %v672
        %v681 = vsub.f32 %v665, %v673
        %v682 = vsub.f32 %v666, %v674
        %v683 = vsub.f32 %v667, %v675
        %v684 = vsel %vm177, 1, 0
        %vm685 = vcmp.eq.s32.totalorder %v684, 1
        %v686 = vsel %vm685, %v484, %v377
        %v687 = vsel %vm685, %v485, %v377
        %v688 = vsel %vm685, %v486, %v377
        %v689 = vsel %vm685, %v487, %v377
        %v690 = vsel %vm685, %v488, %v377
        %v691 = vsel %vm685, %v489, %v377
        %v692 = vsel %vm685, %v490, %v377
        %v693 = vsel %vm685, %v491, %v377
        %v694 = vsel %vm685, %v676, %v378
        %v695 = vsel %vm685, %v677, %v378
        %v696 = vsel %vm685, %v678, %v378
        %v697 = vsel %vm685, %v679, %v378
        %v698 = vsel %vm685, %v680, %v378
        %v699 = vsel %vm685, %v681, %v378
        %v700 = vsel %vm685, %v682, %v378
        %v701 = vsel %vm685, %v683, %v378
        %v702 = vadd.f32 %v694, 1e-05
        %v703 = vadd.f32 %v695, 1e-05
        %v704 = vadd.f32 %v696, 1e-05
        %v705 = vadd.f32 %v697, 1e-05
        %v706 = vadd.f32 %v698, 1e-05
        %v707 = vadd.f32 %v699, 1e-05
        %v708 = vadd.f32 %v700, 1e-05
        %v709 = vadd.f32 %v701, 1e-05
        %v710 = vrsqrt.pop %v702
        %v711 = vrsqrt.pop %v703
        %v712 = vrsqrt.pop %v704
        %v713 = vrsqrt.pop %v705
        %v714 = vrsqrt.pop %v706
        %v715 = vrsqrt.pop %v707
        %v716 = vrsqrt.pop %v708
        %v717 = vrsqrt.pop %v709
        %v718 = vmul.f32 %v375, %v710
        %v719 = vmul.f32 %v375, %v711
        %v720 = vmul.f32 %v375, %v712
        %v721 = vmul.f32 %v375, %v713
        %v722 = vmul.f32 %v375, %v714
        %v723 = vmul.f32 %v375, %v715
        %v724 = vmul.f32 %v375, %v716
        %v725 = vmul.f32 %v375, %v717
        %v726 = vmul.f32 %v686, %v718
        %v727 = vmul.f32 %v687, %v719
        %v728 = vmul.f32 %v688, %v720
        %v729 = vmul.f32 %v689, %v721
        %v730 = vmul.f32 %v690, %v722
        %v731 = vmul.f32 %v691, %v723
        %v732 = vmul.f32 %v692, %v724
        %v733 = vmul.f32 %v693, %v725
        %v734 = vsub.f32 %v376, %v726
        %v735 = vsub.f32 %v376, %v727
        %v736 = vsub.f32 %v376, %v728
        %v737 = vsub.f32 %v376, %v729
        %v738 = vsub.f32 %v376, %v730
        %v739 = vsub.f32 %v376, %v731
        %v740 = vsub.f32 %v376, %v732
        %v741 = vsub.f32 %v376, %v733
        %v742 = vlaneseq
        %v743 = vshrl.u32 %v742, 7
        %v744 = vsub.s32 0, %v743
        %v745 = vrot.slane %v718, %v744
        %v746 = vlaneseq
        %v747 = vshrl.u32 %v746, 7
        %v748 = vsub.s32 0, %v747
        %v749 = vrot.slane %v719, %v748
        %v750 = vlaneseq
        %v751 = vshrl.u32 %v750, 7
        %v752 = vsub.s32 0, %v751
        %v753 = vrot.slane %v720, %v752
        %v754 = vlaneseq
        %v755 = vshrl.u32 %v754, 7
        %v756 = vsub.s32 0, %v755
        %v757 = vrot.slane %v721, %v756
        %v758 = vlaneseq
        %v759 = vshrl.u32 %v758, 7
        %v760 = vsub.s32 0, %v759
        %v761 = vrot.slane %v722, %v760
        %v762 = vlaneseq
        %v763 = vshrl.u32 %v762, 7
        %v764 = vsub.s32 0, %v763
        %v765 = vrot.slane %v723, %v764
        %v766 = vlaneseq
        %v767 = vshrl.u32 %v766, 7
        %v768 = vsub.s32 0, %v767
        %v769 = vrot.slane %v724, %v768
        %v770 = vlaneseq
        %v771 = vshrl.u32 %v770, 7
        %v772 = vsub.s32 0, %v771
        %v773 = vrot.slane %v725, %v772
        %v774 = vmul.f32 %v311, %v745
        %v775 = vmul.f32 %v312, %v745
        %v776 = vmul.f32 %v313, %v745
        %v777 = vmul.f32 %v314, %v745
        %v778 = vmul.f32 %v315, %v745
        %v779 = vmul.f32 %v316, %v745
        %v780 = vmul.f32 %v317, %v745
        %v781 = vmul.f32 %v318, %v745
        %v782 = vmul.f32 %v319, %v749
        %v783 = vmul.f32 %v320, %v749
        %v784 = vmul.f32 %v321, %v749
        %v785 = vmul.f32 %v322, %v749
        %v786 = vmul.f32 %v323, %v749
        %v787 = vmul.f32 %v324, %v749
        %v788 = vmul.f32 %v325, %v749
        %v789 = vmul.f32 %v326, %v749
        %v790 = vmul.f32 %v327, %v753
        %v791 = vmul.f32 %v328, %v753
        %v792 = vmul.f32 %v329, %v753
        %v793 = vmul.f32 %v330, %v753
        %v794 = vmul.f32 %v331, %v753
        %v795 = vmul.f32 %v332, %v753
        %v796 = vmul.f32 %v333, %v753
        %v797 = vmul.f32 %v334, %v753
        %v798 = vmul.f32 %v335, %v757
        %v799 = vmul.f32 %v336, %v757
        %v800 = vmul.f32 %v337, %v757
        %v801 = vmul.f32 %v338, %v757
        %v802 = vmul.f32 %v339, %v757
        %v803 = vmul.f32 %v340, %v757
        %v804 = vmul.f32 %v341, %v757
        %v805 = vmul.f32 %v342, %v757
        %v806 = vmul.f32 %v343, %v761
        %v807 = vmul.f32 %v344, %v761
        %v808 = vmul.f32 %v345, %v761
        %v809 = vmul.f32 %v346, %v761
        %v810 = vmul.f32 %v347, %v761
        %v811 = vmul.f32 %v348, %v761
        %v812 = vmul.f32 %v349, %v761
        %v813 = vmul.f32 %v350, %v761
        %v814 = vmul.f32 %v351, %v765
        %v815 = vmul.f32 %v352, %v765
        %v816 = vmul.f32 %v353, %v765
        %v817 = vmul.f32 %v354, %v765
        %v818 = vmul.f32 %v355, %v765
        %v819 = vmul.f32 %v356, %v765
        %v820 = vmul.f32 %v357, %v765
        %v821 = vmul.f32 %v358, %v765
        %v822 = vmul.f32 %v359, %v769
        %v823 = vmul.f32 %v360, %v769
        %v824 = vmul.f32 %v361, %v769
        %v825 = vmul.f32 %v362, %v769
        %v826 = vmul.f32 %v363, %v769
        %v827 = vmul.f32 %v364, %v769
        %v828 = vmul.f32 %v365, %v769
        %v829 = vmul.f32 %v366, %v769
        %v830 = vmul.f32 %v367, %v773
        %v831 = vmul.f32 %v368, %v773
        %v832 = vmul.f32 %v369, %v773
        %v833 = vmul.f32 %v370, %v773
        %v834 = vmul.f32 %v371, %v773
        %v835 = vmul.f32 %v372, %v773
        %v836 = vmul.f32 %v373, %v773
        %v837 = vmul.f32 %v374, %v773
        %v838 = vlaneseq
        %v839 = vshrl.u32 %v838, 7
        %v840 = vsub.s32 0, %v839
        %v841 = vrot.slane %v734, %v840
        %v842 = vlaneseq
        %v843 = vshrl.u32 %v842, 7
        %v844 = vsub.s32 0, %v843
        %v845 = vrot.slane %v735, %v844
        %v846 = vlaneseq
        %v847 = vshrl.u32 %v846, 7
        %v848 = vsub.s32 0, %v847
        %v849 = vrot.slane %v736, %v848
        %v850 = vlaneseq
        %v851 = vshrl.u32 %v850, 7
        %v852 = vsub.s32 0, %v851
        %v853 = vrot.slane %v737, %v852
        %v854 = vlaneseq
        %v855 = vshrl.u32 %v854, 7
        %v856 = vsub.s32 0, %v855
        %v857 = vrot.slane %v738, %v856
        %v858 = vlaneseq
        %v859 = vshrl.u32 %v858, 7
        %v860 = vsub.s32 0, %v859
        %v861 = vrot.slane %v739, %v860
        %v862 = vlaneseq
        %v863 = vshrl.u32 %v862, 7
        %v864 = vsub.s32 0, %v863
        %v865 = vrot.slane %v740, %v864
        %v866 = vlaneseq
        %v867 = vshrl.u32 %v866, 7
        %v868 = vsub.s32 0, %v867
        %v869 = vrot.slane %v741, %v868
        %v870 = vadd.f32 %v774, %v841
        %v871 = vadd.f32 %v775, %v841
        %v872 = vadd.f32 %v776, %v841
        %v873 = vadd.f32 %v777, %v841
        %v874 = vadd.f32 %v778, %v841
        %v875 = vadd.f32 %v779, %v841
        %v876 = vadd.f32 %v780, %v841
        %v877 = vadd.f32 %v781, %v841
        %v878 = vadd.f32 %v782, %v845
        %v879 = vadd.f32 %v783, %v845
        %v880 = vadd.f32 %v784, %v845
        %v881 = vadd.f32 %v785, %v845
        %v882 = vadd.f32 %v786, %v845
        %v883 = vadd.f32 %v787, %v845
        %v884 = vadd.f32 %v788, %v845
        %v885 = vadd.f32 %v789, %v845
        %v886 = vadd.f32 %v790, %v849
        %v887 = vadd.f32 %v791, %v849
        %v888 = vadd.f32 %v792, %v849
        %v889 = vadd.f32 %v793, %v849
        %v890 = vadd.f32 %v794, %v849
        %v891 = vadd.f32 %v795, %v849
        %v892 = vadd.f32 %v796, %v849
        %v893 = vadd.f32 %v797, %v849
        %v894 = vadd.f32 %v798, %v853
        %v895 = vadd.f32 %v799, %v853
        %v896 = vadd.f32 %v800, %v853
        %v897 = vadd.f32 %v801, %v853
        %v898 = vadd.f32 %v802, %v853
        %v899 = vadd.f32 %v803, %v853
        %v900 = vadd.f32 %v804, %v853
        %v901 = vadd.f32 %v805, %v853
        %v902 = vadd.f32 %v806, %v857
        %v903 = vadd.f32 %v807, %v857
        %v904 = vadd.f32 %v808, %v857
        %v905 = vadd.f32 %v809, %v857
        %v906 = vadd.f32 %v810, %v857
        %v907 = vadd.f32 %v811, %v857
        %v908 = vadd.f32 %v812, %v857
        %v909 = vadd.f32 %v813, %v857
        %v910 = vadd.f32 %v814, %v861
        %v911 = vadd.f32 %v815, %v861
        %v912 = vadd.f32 %v816, %v861
        %v913 = vadd.f32 %v817, %v861
        %v914 = vadd.f32 %v818, %v861
        %v915 = vadd.f32 %v819, %v861
        %v916 = vadd.f32 %v820, %v861
        %v917 = vadd.f32 %v821, %v861
        %v918 = vadd.f32 %v822, %v865
        %v919 = vadd.f32 %v823, %v865
        %v920 = vadd.f32 %v824, %v865
        %v921 = vadd.f32 %v825, %v865
        %v922 = vadd.f32 %v826, %v865
        %v923 = vadd.f32 %v827, %v865
        %v924 = vadd.f32 %v828, %v865
        %v925 = vadd.f32 %v829, %v865
        %v926 = vadd.f32 %v830, %v869
        %v927 = vadd.f32 %v831, %v869
        %v928 = vadd.f32 %v832, %v869
        %v929 = vadd.f32 %v833, %v869
        %v930 = vadd.f32 %v834, %v869
        %v931 = vadd.f32 %v835, %v869
        %v932 = vadd.f32 %v836, %v869
        %v933 = vadd.f32 %v837, %v869
        %v934 = vmax.f32 %v870, 0.0
        %v935 = vmax.f32 %v871, 0.0
        %v936 = vmax.f32 %v872, 0.0
        %v937 = vmax.f32 %v873, 0.0
        %v938 = vmax.f32 %v874, 0.0
        %v939 = vmax.f32 %v875, 0.0
        %v940 = vmax.f32 %v876, 0.0
        %v941 = vmax.f32 %v877, 0.0
        %v942 = vmax.f32 %v878, 0.0
        %v943 = vmax.f32 %v879, 0.0
        %v944 = vmax.f32 %v880, 0.0
        %v945 = vmax.f32 %v881, 0.0
        %v946 = vmax.f32 %v882, 0.0
        %v947 = vmax.f32 %v883, 0.0
        %v948 = vmax.f32 %v884, 0.0
        %v949 = vmax.f32 %v885, 0.0
        %v950 = vmax.f32 %v886, 0.0
        %v951 = vmax.f32 %v887, 0.0
        %v952 = vmax.f32 %v888, 0.0
        %v953 = vmax.f32 %v889, 0.0
        %v954 = vmax.f32 %v890, 0.0
        %v955 = vmax.f32 %v891, 0.0
        %v956 = vmax.f32 %v892, 0.0
        %v957 = vmax.f32 %v893, 0.0
        %v958 = vmax.f32 %v894, 0.0
        %v959 = vmax.f32 %v895, 0.0
        %v960 = vmax.f32 %v896, 0.0
        %v961 = vmax.f32 %v897, 0.0
        %v962 = vmax.f32 %v898, 0.0
        %v963 = vmax.f32 %v899, 0.0
        %v964 = vmax.f32 %v900, 0.0
        %v965 = vmax.f32 %v901, 0.0
        %v966 = vmax.f32 %v902, 0.0
        %v967 = vmax.f32 %v903, 0.0
        %v968 = vmax.f32 %v904, 0.0
        %v969 = vmax.f32 %v905, 0.0
        %v970 = vmax.f32 %v906, 0.0
        %v971 = vmax.f32 %v907, 0.0
        %v972 = vmax.f32 %v908, 0.0
        %v973 = vmax.f32 %v909, 0.0
        %v974 = vmax.f32 %v910, 0.0
        %v975 = vmax.f32 %v911, 0.0
        %v976 = vmax.f32 %v912, 0.0
        %v977 = vmax.f32 %v913, 0.0
        %v978 = vmax.f32 %v914, 0.0
        %v979 = vmax.f32 %v915, 0.0
        %v980 = vmax.f32 %v916, 0.0
        %v981 = vmax.f32 %v917, 0.0
        %v982 = vmax.f32 %v918, 0.0
        %v983 = vmax.f32 %v919, 0.0
        %v984 = vmax.f32 %v920, 0.0
        %v985 = vmax.f32 %v921, 0.0
        %v986 = vmax.f32 %v922, 0.0
        %v987 = vmax.f32 %v923, 0.0
        %v988 = vmax.f32 %v924, 0.0
        %v989 = vmax.f32 %v925, 0.0
        %v990 = vmax.f32 %v926, 0.0
        %v991 = vmax.f32 %v927, 0.0
        %v992 = vmax.f32 %v928, 0.0
        %v993 = vmax.f32 %v929, 0.0
        %v994 = vmax.f32 %v930, 0.0
        %v995 = vmax.f32 %v931, 0.0
        %v996 = vmax.f32 %v932, 0.0
        %v997 = vmax.f32 %v933, 0.0
        %v998 = vpack.c.bf16 %v935, %v934
        %v999 = vpack.c.bf16 %v937, %v936
        %v1000 = vpack.c.bf16 %v939, %v938
        %v1001 = vpack.c.bf16 %v941, %v940
        %v1002 = vpack.c.bf16 %v943, %v942
        %v1003 = vpack.c.bf16 %v945, %v944
        %v1004 = vpack.c.bf16 %v947, %v946
        %v1005 = vpack.c.bf16 %v949, %v948
        %v1006 = vpack.c.bf16 %v951, %v950
        %v1007 = vpack.c.bf16 %v953, %v952
        %v1008 = vpack.c.bf16 %v955, %v954
        %v1009 = vpack.c.bf16 %v957, %v956
        %v1010 = vpack.c.bf16 %v959, %v958
        %v1011 = vpack.c.bf16 %v961, %v960
        %v1012 = vpack.c.bf16 %v963, %v962
        %v1013 = vpack.c.bf16 %v965, %v964
        %v1014 = vpack.c.bf16 %v967, %v966
        %v1015 = vpack.c.bf16 %v969, %v968
        %v1016 = vpack.c.bf16 %v971, %v970
        %v1017 = vpack.c.bf16 %v973, %v972
        %v1018 = vpack.c.bf16 %v975, %v974
        %v1019 = vpack.c.bf16 %v977, %v976
        %v1020 = vpack.c.bf16 %v979, %v978
        %v1021 = vpack.c.bf16 %v981, %v980
        %v1022 = vpack.c.bf16 %v983, %v982
        %v1023 = vpack.c.bf16 %v985, %v984
        %v1024 = vpack.c.bf16 %v987, %v986
        %v1025 = vpack.c.bf16 %v989, %v988
        %v1026 = vpack.c.bf16 %v991, %v990
        %v1027 = vpack.c.bf16 %v993, %v992
        %v1028 = vpack.c.bf16 %v995, %v994
        %v1029 = vpack.c.bf16 %v997, %v996
        %v1030 = vld [vmem:[%s2] sm:$0xf]
        %v1031 = vld [vmem:[%s2 + $0x4] sm:$0xf]
        %v1032 = vld [vmem:[%s2 + $0x8] sm:$0xf]
        %v1033 = vld [vmem:[%s2 + $0xc] sm:$0xf]
        %v1034 = vld [vmem:[%s2 + $0x10] sm:$0xf]
        %v1035 = vld [vmem:[%s2 + $0x14] sm:$0xf]
        %v1036 = vld [vmem:[%s2 + $0x18] sm:$0xf]
        %v1037 = vld [vmem:[%s2 + $0x1c] sm:$0xf]
        %v1038 = vld [vmem:[%s2 + $0x20] sm:$0xf]
        %v1039 = vld [vmem:[%s2 + $0x24] sm:$0xf]
        %v1040 = vld [vmem:[%s2 + $0x28] sm:$0xf]
        %v1041 = vld [vmem:[%s2 + $0x2c] sm:$0xf]
        %v1042 = vld [vmem:[%s2 + $0x30] sm:$0xf]
        %v1043 = vld [vmem:[%s2 + $0x34] sm:$0xf]
        %v1044 = vld [vmem:[%s2 + $0x38] sm:$0xf]
        %v1045 = vld [vmem:[%s2 + $0x3c] sm:$0xf]
        %v1062 = vunpack.c.l.b16 %v1030
        %v1063 = vunpack.c.l.b16 %v1031
        %v1064 = vunpack.c.l.b16 %v1032
        %v1065 = vunpack.c.l.b16 %v1033
        %v1066 = vunpack.c.l.b16 %v1034
        %v1067 = vunpack.c.l.b16 %v1035
        %v1068 = vunpack.c.l.b16 %v1036
        %v1069 = vunpack.c.l.b16 %v1037
        %v1070 = vunpack.c.l.b16 %v1038
        %v1071 = vunpack.c.l.b16 %v1039
        %v1072 = vunpack.c.l.b16 %v1040
        %v1073 = vunpack.c.l.b16 %v1041
        %v1074 = vunpack.c.l.b16 %v1042
        %v1075 = vunpack.c.l.b16 %v1043
        %v1076 = vunpack.c.l.b16 %v1044
        %v1077 = vunpack.c.l.b16 %v1045
        %v1078 = vpack.c.b16 %v1063, %v1062
        %v1079 = vpack.c.b16 %v1065, %v1064
        %v1080 = vpack.c.b16 %v1067, %v1066
        %v1081 = vpack.c.b16 %v1069, %v1068
        %v1082 = vpack.c.b16 %v1071, %v1070
        %v1083 = vpack.c.b16 %v1073, %v1072
        %v1084 = vpack.c.b16 %v1075, %v1074
        %v1085 = vpack.c.b16 %v1077, %v1076
        %1094 = vmatprep.subr.bf16.mxu0 0
        %1095 = vmatpush1.bf16.msra.mxu0 %v1085
        %1096 = vmatprep.subr.bf16.mxu0 0
        %1097 = vmatpush1.bf16.msra.mxu0 %v1084
        %1098 = vmatprep.subr.bf16.mxu0 0
        %1099 = vmatpush1.bf16.msra.mxu0 %v1083
        %1100 = vmatprep.subr.bf16.mxu0 0
        %1101 = vmatpush1.bf16.msra.mxu0 %v1082
        %1102 = vmatprep.subr.bf16.mxu0 0
        %1103 = vmatpush1.bf16.msra.mxu0 %v1081
        %1104 = vmatprep.subr.bf16.mxu0 0
        %1105 = vmatpush1.bf16.msra.mxu0 %v1080
        %1106 = vmatprep.subr.bf16.mxu0 0
        %1107 = vmatpush1.bf16.msra.mxu0 %v1079
        %1108 = vmatprep.subr.bf16.mxu0 0
        %1109 = vmatpush1.bf16.msra.mxu0 %v1078
        %1110 = vmatprep.subr.bf16.mxu0 0
        %1111 = vmatpush2.bf16.msra.mxu0 0
        %1112 = vmatprep.subr.bf16.mxu0 0
        %1113 = vmatpush2.bf16.msra.mxu0 0
        %1114 = vmatprep.subr.bf16.mxu0 0
        %1115 = vmatpush2.bf16.msra.mxu0 0
        %1116 = vmatprep.subr.bf16.mxu0 0
        %1117 = vmatpush2.bf16.msra.mxu0 0
        %1118 = vmatprep.subr.bf16.mxu0 0
        %1119 = vmatpush2.bf16.msra.mxu0 0
        %1120 = vmatprep.subr.bf16.mxu0 0
        %1121 = vmatpush2.bf16.msra.mxu0 0
        %1122 = vmatprep.subr.bf16.mxu0 0
        %1123 = vmatpush2.bf16.msra.mxu0 0
        %1124 = vmatprep.subr.bf16.mxu0 0
        %1125 = vmatpush2.bf16.msra.mxu0 0
        %1126 = vmatprep.mubr.bf16.mxu0 0
        %1127 = vmatmul.mubr.bf16.gmra.mxu0 %v998
        %v1128 = vpop.f32.mrf.mxu0
        %v1129 = vadd.f32 0.0, %v1128
        %v1130 = vpop.f32.mrf.mxu0
        %v1131 = vpop.f32.mrf.mxu0
        %v1132 = vadd.f32 0.0, %v1131
        %v1133 = vpop.f32.mrf.mxu0
        %1134 = vmatprep.mubr.bf16.mxu0 0
        %1135 = vmatmul.mubr.bf16.gmra.mxu0 %v999
        %v1136 = vpop.f32.mrf.mxu0
        %v1137 = vadd.f32 0.0, %v1136
        %v1138 = vpop.f32.mrf.mxu0
        %v1139 = vpop.f32.mrf.mxu0
        %v1140 = vadd.f32 0.0, %v1139
        %v1141 = vpop.f32.mrf.mxu0
        %1142 = vmatprep.mubr.bf16.mxu0 0
        %1143 = vmatmul.mubr.bf16.gmra.mxu0 %v1000
        %v1144 = vpop.f32.mrf.mxu0
        %v1145 = vadd.f32 0.0, %v1144
        %v1146 = vpop.f32.mrf.mxu0
        %v1147 = vpop.f32.mrf.mxu0
        %v1148 = vadd.f32 0.0, %v1147
        %v1149 = vpop.f32.mrf.mxu0
        %1150 = vmatprep.mubr.bf16.mxu0 0
        %1151 = vmatmul.mubr.bf16.gmra.mxu0 %v1001
        %v1152 = vpop.f32.mrf.mxu0
        %v1153 = vadd.f32 0.0, %v1152
        %v1154 = vpop.f32.mrf.mxu0
        %v1155 = vpop.f32.mrf.mxu0
        %v1156 = vadd.f32 0.0, %v1155
        %v1157 = vpop.f32.mrf.mxu0
        %1158 = vmatprep.mubr.bf16.mxu0 0
        %1159 = vmatmul.mubr.bf16.gmra.mxu0 %v1002
        %v1160 = vpop.f32.mrf.mxu0
        %v1161 = vadd.f32 0.0, %v1160
        %v1162 = vpop.f32.mrf.mxu0
        %v1163 = vpop.f32.mrf.mxu0
        %v1164 = vadd.f32 0.0, %v1163
        %v1165 = vpop.f32.mrf.mxu0
        %1166 = vmatprep.mubr.bf16.mxu0 0
        %1167 = vmatmul.mubr.bf16.gmra.mxu0 %v1003
        %v1168 = vpop.f32.mrf.mxu0
        %v1169 = vadd.f32 0.0, %v1168
        %v1170 = vpop.f32.mrf.mxu0
        %v1171 = vpop.f32.mrf.mxu0
        %v1172 = vadd.f32 0.0, %v1171
        %v1173 = vpop.f32.mrf.mxu0
        %1174 = vmatprep.mubr.bf16.mxu0 0
        %1175 = vmatmul.mubr.bf16.gmra.mxu0 %v1004
        %v1176 = vpop.f32.mrf.mxu0
        %v1177 = vadd.f32 0.0, %v1176
        %v1178 = vpop.f32.mrf.mxu0
        %v1179 = vpop.f32.mrf.mxu0
        %v1180 = vadd.f32 0.0, %v1179
        %v1181 = vpop.f32.mrf.mxu0
        %1182 = vmatprep.mubr.bf16.mxu0 0
        %1183 = vmatmul.mubr.bf16.gmra.mxu0 %v1005
        %v1184 = vpop.f32.mrf.mxu0
        %v1185 = vadd.f32 0.0, %v1184
        %v1186 = vpop.f32.mrf.mxu0
        %v1187 = vpop.f32.mrf.mxu0
        %v1188 = vadd.f32 0.0, %v1187
        %v1189 = vpop.f32.mrf.mxu0
        %1190 = vmatprep.mubr.bf16.mxu0 0
        %1191 = vmatmul.mubr.bf16.gmra.mxu0 %v1006
        %v1192 = vpop.f32.mrf.mxu0
        %v1193 = vadd.f32 0.0, %v1192
        %v1194 = vpop.f32.mrf.mxu0
        %v1195 = vpop.f32.mrf.mxu0
        %v1196 = vadd.f32 0.0, %v1195
        %v1197 = vpop.f32.mrf.mxu0
        %1198 = vmatprep.mubr.bf16.mxu0 0
        %1199 = vmatmul.mubr.bf16.gmra.mxu0 %v1007
        %v1200 = vpop.f32.mrf.mxu0
        %v1201 = vadd.f32 0.0, %v1200
        %v1202 = vpop.f32.mrf.mxu0
        %v1203 = vpop.f32.mrf.mxu0
        %v1204 = vadd.f32 0.0, %v1203
        %v1205 = vpop.f32.mrf.mxu0
        %1206 = vmatprep.mubr.bf16.mxu0 0
        %1207 = vmatmul.mubr.bf16.gmra.mxu0 %v1008
        %v1208 = vpop.f32.mrf.mxu0
        %v1209 = vadd.f32 0.0, %v1208
        %v1210 = vpop.f32.mrf.mxu0
        %v1211 = vpop.f32.mrf.mxu0
        %v1212 = vadd.f32 0.0, %v1211
        %v1213 = vpop.f32.mrf.mxu0
        %1214 = vmatprep.mubr.bf16.mxu0 0
        %1215 = vmatmul.mubr.bf16.gmra.mxu0 %v1009
        %v1216 = vpop.f32.mrf.mxu0
        %v1217 = vadd.f32 0.0, %v1216
        %v1218 = vpop.f32.mrf.mxu0
        %v1219 = vpop.f32.mrf.mxu0
        %v1220 = vadd.f32 0.0, %v1219
        %v1221 = vpop.f32.mrf.mxu0
        %1222 = vmatprep.mubr.bf16.mxu0 0
        %1223 = vmatmul.mubr.bf16.gmra.mxu0 %v1010
        %v1224 = vpop.f32.mrf.mxu0
        %v1225 = vadd.f32 0.0, %v1224
        %v1226 = vpop.f32.mrf.mxu0
        %v1227 = vpop.f32.mrf.mxu0
        %v1228 = vadd.f32 0.0, %v1227
        %v1229 = vpop.f32.mrf.mxu0
        %1230 = vmatprep.mubr.bf16.mxu0 0
        %1231 = vmatmul.mubr.bf16.gmra.mxu0 %v1011
        %v1232 = vpop.f32.mrf.mxu0
        %v1233 = vadd.f32 0.0, %v1232
        %v1234 = vpop.f32.mrf.mxu0
        %v1235 = vpop.f32.mrf.mxu0
        %v1236 = vadd.f32 0.0, %v1235
        %v1237 = vpop.f32.mrf.mxu0
        %1238 = vmatprep.mubr.bf16.mxu0 0
        %1239 = vmatmul.mubr.bf16.gmra.mxu0 %v1012
        %v1240 = vpop.f32.mrf.mxu0
        %v1241 = vadd.f32 0.0, %v1240
        %v1242 = vpop.f32.mrf.mxu0
        %v1243 = vpop.f32.mrf.mxu0
        %v1244 = vadd.f32 0.0, %v1243
        %v1245 = vpop.f32.mrf.mxu0
        %1246 = vmatprep.mubr.bf16.mxu0 0
        %1247 = vmatmul.mubr.bf16.gmra.mxu0 %v1013
        %v1248 = vpop.f32.mrf.mxu0
        %v1249 = vadd.f32 0.0, %v1248
        %v1250 = vpop.f32.mrf.mxu0
        %v1251 = vpop.f32.mrf.mxu0
        %v1252 = vadd.f32 0.0, %v1251
        %v1253 = vpop.f32.mrf.mxu0
        %1254 = vmatprep.mubr.bf16.mxu0 0
        %1255 = vmatmul.mubr.bf16.gmra.mxu0 %v1014
        %v1256 = vpop.f32.mrf.mxu0
        %v1257 = vadd.f32 0.0, %v1256
        %v1258 = vpop.f32.mrf.mxu0
        %v1259 = vpop.f32.mrf.mxu0
        %v1260 = vadd.f32 0.0, %v1259
        %v1261 = vpop.f32.mrf.mxu0
        %1262 = vmatprep.mubr.bf16.mxu0 0
        %1263 = vmatmul.mubr.bf16.gmra.mxu0 %v1015
        %v1264 = vpop.f32.mrf.mxu0
        %v1265 = vadd.f32 0.0, %v1264
        %v1266 = vpop.f32.mrf.mxu0
        %v1267 = vpop.f32.mrf.mxu0
        %v1268 = vadd.f32 0.0, %v1267
        %v1269 = vpop.f32.mrf.mxu0
        %1270 = vmatprep.mubr.bf16.mxu0 0
        %1271 = vmatmul.mubr.bf16.gmra.mxu0 %v1016
        %v1272 = vpop.f32.mrf.mxu0
        %v1273 = vadd.f32 0.0, %v1272
        %v1274 = vpop.f32.mrf.mxu0
        %v1275 = vpop.f32.mrf.mxu0
        %v1276 = vadd.f32 0.0, %v1275
        %v1277 = vpop.f32.mrf.mxu0
        %1278 = vmatprep.mubr.bf16.mxu0 0
        %1279 = vmatmul.mubr.bf16.gmra.mxu0 %v1017
        %v1280 = vpop.f32.mrf.mxu0
        %v1281 = vadd.f32 0.0, %v1280
        %v1282 = vpop.f32.mrf.mxu0
        %v1283 = vpop.f32.mrf.mxu0
        %v1284 = vadd.f32 0.0, %v1283
        %v1285 = vpop.f32.mrf.mxu0
        %1286 = vmatprep.mubr.bf16.mxu0 0
        %1287 = vmatmul.mubr.bf16.gmra.mxu0 %v1018
        %v1288 = vpop.f32.mrf.mxu0
        %v1289 = vadd.f32 0.0, %v1288
        %v1290 = vpop.f32.mrf.mxu0
        %v1291 = vpop.f32.mrf.mxu0
        %v1292 = vadd.f32 0.0, %v1291
        %v1293 = vpop.f32.mrf.mxu0
        %1294 = vmatprep.mubr.bf16.mxu0 0
        %1295 = vmatmul.mubr.bf16.gmra.mxu0 %v1019
        %v1296 = vpop.f32.mrf.mxu0
        %v1297 = vadd.f32 0.0, %v1296
        %v1298 = vpop.f32.mrf.mxu0
        %v1299 = vpop.f32.mrf.mxu0
        %v1300 = vadd.f32 0.0, %v1299
        %v1301 = vpop.f32.mrf.mxu0
        %1302 = vmatprep.mubr.bf16.mxu0 0
        %1303 = vmatmul.mubr.bf16.gmra.mxu0 %v1020
        %v1304 = vpop.f32.mrf.mxu0
        %v1305 = vadd.f32 0.0, %v1304
        %v1306 = vpop.f32.mrf.mxu0
        %v1307 = vpop.f32.mrf.mxu0
        %v1308 = vadd.f32 0.0, %v1307
        %v1309 = vpop.f32.mrf.mxu0
        %1310 = vmatprep.mubr.bf16.mxu0 0
        %1311 = vmatmul.mubr.bf16.gmra.mxu0 %v1021
        %v1312 = vpop.f32.mrf.mxu0
        %v1313 = vadd.f32 0.0, %v1312
        %v1314 = vpop.f32.mrf.mxu0
        %v1315 = vpop.f32.mrf.mxu0
        %v1316 = vadd.f32 0.0, %v1315
        %v1317 = vpop.f32.mrf.mxu0
        %1318 = vmatprep.mubr.bf16.mxu0 0
        %1319 = vmatmul.mubr.bf16.gmra.mxu0 %v1022
        %v1320 = vpop.f32.mrf.mxu0
        %v1321 = vadd.f32 0.0, %v1320
        %v1322 = vpop.f32.mrf.mxu0
        %v1323 = vpop.f32.mrf.mxu0
        %v1324 = vadd.f32 0.0, %v1323
        %v1325 = vpop.f32.mrf.mxu0
        %1326 = vmatprep.mubr.bf16.mxu0 0
        %1327 = vmatmul.mubr.bf16.gmra.mxu0 %v1023
        %v1328 = vpop.f32.mrf.mxu0
        %v1329 = vadd.f32 0.0, %v1328
        %v1330 = vpop.f32.mrf.mxu0
        %v1331 = vpop.f32.mrf.mxu0
        %v1332 = vadd.f32 0.0, %v1331
        %v1333 = vpop.f32.mrf.mxu0
        %1334 = vmatprep.mubr.bf16.mxu0 0
        %1335 = vmatmul.mubr.bf16.gmra.mxu0 %v1024
        %v1336 = vpop.f32.mrf.mxu0
        %v1337 = vadd.f32 0.0, %v1336
        %v1338 = vpop.f32.mrf.mxu0
        %v1339 = vpop.f32.mrf.mxu0
        %v1340 = vadd.f32 0.0, %v1339
        %v1341 = vpop.f32.mrf.mxu0
        %1342 = vmatprep.mubr.bf16.mxu0 0
        %1343 = vmatmul.mubr.bf16.gmra.mxu0 %v1025
        %v1344 = vpop.f32.mrf.mxu0
        %v1345 = vadd.f32 0.0, %v1344
        %v1346 = vpop.f32.mrf.mxu0
        %v1347 = vpop.f32.mrf.mxu0
        %v1348 = vadd.f32 0.0, %v1347
        %v1349 = vpop.f32.mrf.mxu0
        %1350 = vmatprep.mubr.bf16.mxu0 0
        %1351 = vmatmul.mubr.bf16.gmra.mxu0 %v1026
        %v1352 = vpop.f32.mrf.mxu0
        %v1353 = vadd.f32 0.0, %v1352
        %v1354 = vpop.f32.mrf.mxu0
        %v1355 = vpop.f32.mrf.mxu0
        %v1356 = vadd.f32 0.0, %v1355
        %v1357 = vpop.f32.mrf.mxu0
        %1358 = vmatprep.mubr.bf16.mxu0 0
        %1359 = vmatmul.mubr.bf16.gmra.mxu0 %v1027
        %v1360 = vpop.f32.mrf.mxu0
        %v1361 = vadd.f32 0.0, %v1360
        %v1362 = vpop.f32.mrf.mxu0
        %v1363 = vpop.f32.mrf.mxu0
        %v1364 = vadd.f32 0.0, %v1363
        %v1365 = vpop.f32.mrf.mxu0
        %1366 = vmatprep.mubr.bf16.mxu0 0
        %1367 = vmatmul.mubr.bf16.gmra.mxu0 %v1028
        %v1368 = vpop.f32.mrf.mxu0
        %v1369 = vadd.f32 0.0, %v1368
        %v1370 = vpop.f32.mrf.mxu0
        %v1371 = vpop.f32.mrf.mxu0
        %v1372 = vadd.f32 0.0, %v1371
        %v1373 = vpop.f32.mrf.mxu0
        %1374 = vmatprep.mubr.bf16.mxu0 0
        %1375 = vmatmul.mubr.bf16.gmra.mxu0 %v1029
        %v1376 = vpop.f32.mrf.mxu0
        %v1377 = vadd.f32 0.0, %v1376
        %v1378 = vpop.f32.mrf.mxu0
        %v1379 = vpop.f32.mrf.mxu0
        %v1380 = vadd.f32 0.0, %v1379
        %v1381 = vpop.f32.mrf.mxu0
        %1382 = vdwg.mxu0
        %v1383 = vld [vmem:[%s1 + $0x5] sm:$0x1]
        %v1384 = vlaneseq
        %v1385 = vshrl.u32 %v1384, 7
        %v1386 = vsub.s32 0, %v1385
        %v1387 = vrot.slane %v1383, %v1386
        %v1388 = vadd.f32 %v1129, %v1387
        %v1389 = vadd.f32 %v1132, %v1387
        %v1390 = vadd.f32 %v1137, %v1387
        %v1391 = vadd.f32 %v1140, %v1387
        %v1392 = vadd.f32 %v1145, %v1387
        %v1393 = vadd.f32 %v1148, %v1387
        %v1394 = vadd.f32 %v1153, %v1387
        %v1395 = vadd.f32 %v1156, %v1387
        %v1396 = vadd.f32 %v1161, %v1387
        %v1397 = vadd.f32 %v1164, %v1387
        %v1398 = vadd.f32 %v1169, %v1387
        %v1399 = vadd.f32 %v1172, %v1387
        %v1400 = vadd.f32 %v1177, %v1387
        %v1401 = vadd.f32 %v1180, %v1387
        %v1402 = vadd.f32 %v1185, %v1387
        %v1403 = vadd.f32 %v1188, %v1387
        %v1404 = vadd.f32 %v1193, %v1387
        %v1405 = vadd.f32 %v1196, %v1387
        %v1406 = vadd.f32 %v1201, %v1387
        %v1407 = vadd.f32 %v1204, %v1387
        %v1408 = vadd.f32 %v1209, %v1387
        %v1409 = vadd.f32 %v1212, %v1387
        %v1410 = vadd.f32 %v1217, %v1387
        %v1411 = vadd.f32 %v1220, %v1387
        %v1412 = vadd.f32 %v1225, %v1387
        %v1413 = vadd.f32 %v1228, %v1387
        %v1414 = vadd.f32 %v1233, %v1387
        %v1415 = vadd.f32 %v1236, %v1387
        %v1416 = vadd.f32 %v1241, %v1387
        %v1417 = vadd.f32 %v1244, %v1387
        %v1418 = vadd.f32 %v1249, %v1387
        %v1419 = vadd.f32 %v1252, %v1387
        %v1420 = vadd.f32 %v1257, %v1387
        %v1421 = vadd.f32 %v1260, %v1387
        %v1422 = vadd.f32 %v1265, %v1387
        %v1423 = vadd.f32 %v1268, %v1387
        %v1424 = vadd.f32 %v1273, %v1387
        %v1425 = vadd.f32 %v1276, %v1387
        %v1426 = vadd.f32 %v1281, %v1387
        %v1427 = vadd.f32 %v1284, %v1387
        %v1428 = vadd.f32 %v1289, %v1387
        %v1429 = vadd.f32 %v1292, %v1387
        %v1430 = vadd.f32 %v1297, %v1387
        %v1431 = vadd.f32 %v1300, %v1387
        %v1432 = vadd.f32 %v1305, %v1387
        %v1433 = vadd.f32 %v1308, %v1387
        %v1434 = vadd.f32 %v1313, %v1387
        %v1435 = vadd.f32 %v1316, %v1387
        %v1436 = vadd.f32 %v1321, %v1387
        %v1437 = vadd.f32 %v1324, %v1387
        %v1438 = vadd.f32 %v1329, %v1387
        %v1439 = vadd.f32 %v1332, %v1387
        %v1440 = vadd.f32 %v1337, %v1387
        %v1441 = vadd.f32 %v1340, %v1387
        %v1442 = vadd.f32 %v1345, %v1387
        %v1443 = vadd.f32 %v1348, %v1387
        %v1444 = vadd.f32 %v1353, %v1387
        %v1445 = vadd.f32 %v1356, %v1387
        %v1446 = vadd.f32 %v1361, %v1387
        %v1447 = vadd.f32 %v1364, %v1387
        %v1448 = vadd.f32 %v1369, %v1387
        %v1449 = vadd.f32 %v1372, %v1387
        %v1450 = vadd.f32 %v1377, %v1387
        %v1451 = vadd.f32 %v1380, %v1387
        %v1452 = vld [vmem:[%s1 + $0x6] sm:$0x1]
        %v1453 = vld [vmem:[%s1 + $0x7] sm:$0x1]
        %v1454 = vld [vmem:[%s1 + $0x8] sm:$0x1]
        %v1455 = vld [vmem:[%s1 + $0x9] sm:$0x1]
        %v1456 = vadd.f32 %v1388, %v1389
        %v1457 = vadd.f32 %v1456, %v1390
        %v1458 = vadd.f32 %v1457, %v1391
        %v1459 = vadd.f32 %v1458, %v1392
        %v1460 = vadd.f32 %v1459, %v1393
        %v1461 = vadd.f32 %v1460, %v1394
        %v1462 = vadd.f32 %v1461, %v1395
        %v1463 = vrot.slane %v1462, 4
        %v1464 = vadd.f32 %v1462, %v1463
        %v1465 = vrot.slane %v1464, 2
        %v1466 = vadd.f32 %v1464, %v1465
        %v1467 = vrot.slane %v1466, 1
        %v1468 = vadd.f32 %v1466, %v1467
        %v1469 = vadd.f32 %v1396, %v1397
        %v1470 = vadd.f32 %v1469, %v1398
        %v1471 = vadd.f32 %v1470, %v1399
        %v1472 = vadd.f32 %v1471, %v1400
        %v1473 = vadd.f32 %v1472, %v1401
        %v1474 = vadd.f32 %v1473, %v1402
        %v1475 = vadd.f32 %v1474, %v1403
        %v1476 = vrot.slane %v1475, 4
        %v1477 = vadd.f32 %v1475, %v1476
        %v1478 = vrot.slane %v1477, 2
        %v1479 = vadd.f32 %v1477, %v1478
        %v1480 = vrot.slane %v1479, 1
        %v1481 = vadd.f32 %v1479, %v1480
        %v1482 = vadd.f32 %v1404, %v1405
        %v1483 = vadd.f32 %v1482, %v1406
        %v1484 = vadd.f32 %v1483, %v1407
        %v1485 = vadd.f32 %v1484, %v1408
        %v1486 = vadd.f32 %v1485, %v1409
        %v1487 = vadd.f32 %v1486, %v1410
        %v1488 = vadd.f32 %v1487, %v1411
        %v1489 = vrot.slane %v1488, 4
        %v1490 = vadd.f32 %v1488, %v1489
        %v1491 = vrot.slane %v1490, 2
        %v1492 = vadd.f32 %v1490, %v1491
        %v1493 = vrot.slane %v1492, 1
        %v1494 = vadd.f32 %v1492, %v1493
        %v1495 = vadd.f32 %v1412, %v1413
        %v1496 = vadd.f32 %v1495, %v1414
        %v1497 = vadd.f32 %v1496, %v1415
        %v1498 = vadd.f32 %v1497, %v1416
        %v1499 = vadd.f32 %v1498, %v1417
        %v1500 = vadd.f32 %v1499, %v1418
        %v1501 = vadd.f32 %v1500, %v1419
        %v1502 = vrot.slane %v1501, 4
        %v1503 = vadd.f32 %v1501, %v1502
        %v1504 = vrot.slane %v1503, 2
        %v1505 = vadd.f32 %v1503, %v1504
        %v1506 = vrot.slane %v1505, 1
        %v1507 = vadd.f32 %v1505, %v1506
        %v1508 = vadd.f32 %v1420, %v1421
        %v1509 = vadd.f32 %v1508, %v1422
        %v1510 = vadd.f32 %v1509, %v1423
        %v1511 = vadd.f32 %v1510, %v1424
        %v1512 = vadd.f32 %v1511, %v1425
        %v1513 = vadd.f32 %v1512, %v1426
        %v1514 = vadd.f32 %v1513, %v1427
        %v1515 = vrot.slane %v1514, 4
        %v1516 = vadd.f32 %v1514, %v1515
        %v1517 = vrot.slane %v1516, 2
        %v1518 = vadd.f32 %v1516, %v1517
        %v1519 = vrot.slane %v1518, 1
        %v1520 = vadd.f32 %v1518, %v1519
        %v1521 = vadd.f32 %v1428, %v1429
        %v1522 = vadd.f32 %v1521, %v1430
        %v1523 = vadd.f32 %v1522, %v1431
        %v1524 = vadd.f32 %v1523, %v1432
        %v1525 = vadd.f32 %v1524, %v1433
        %v1526 = vadd.f32 %v1525, %v1434
        %v1527 = vadd.f32 %v1526, %v1435
        %v1528 = vrot.slane %v1527, 4
        %v1529 = vadd.f32 %v1527, %v1528
        %v1530 = vrot.slane %v1529, 2
        %v1531 = vadd.f32 %v1529, %v1530
        %v1532 = vrot.slane %v1531, 1
        %v1533 = vadd.f32 %v1531, %v1532
        %v1534 = vadd.f32 %v1436, %v1437
        %v1535 = vadd.f32 %v1534, %v1438
        %v1536 = vadd.f32 %v1535, %v1439
        %v1537 = vadd.f32 %v1536, %v1440
        %v1538 = vadd.f32 %v1537, %v1441
        %v1539 = vadd.f32 %v1538, %v1442
        %v1540 = vadd.f32 %v1539, %v1443
        %v1541 = vrot.slane %v1540, 4
        %v1542 = vadd.f32 %v1540, %v1541
        %v1543 = vrot.slane %v1542, 2
        %v1544 = vadd.f32 %v1542, %v1543
        %v1545 = vrot.slane %v1544, 1
        %v1546 = vadd.f32 %v1544, %v1545
        %v1547 = vadd.f32 %v1444, %v1445
        %v1548 = vadd.f32 %v1547, %v1446
        %v1549 = vadd.f32 %v1548, %v1447
        %v1550 = vadd.f32 %v1549, %v1448
        %v1551 = vadd.f32 %v1550, %v1449
        %v1552 = vadd.f32 %v1551, %v1450
        %v1553 = vadd.f32 %v1552, %v1451
        %v1554 = vrot.slane %v1553, 4
        %v1555 = vadd.f32 %v1553, %v1554
        %v1556 = vrot.slane %v1555, 2
        %v1557 = vadd.f32 %v1555, %v1556
        %v1558 = vrot.slane %v1557, 1
        %v1559 = vadd.f32 %v1557, %v1558
        %v1560 = vmul.f32 %v1468, %v483
        %v1561 = vmul.f32 %v1481, %v483
        %v1562 = vmul.f32 %v1494, %v483
        %v1563 = vmul.f32 %v1507, %v483
        %v1564 = vmul.f32 %v1520, %v483
        %v1565 = vmul.f32 %v1533, %v483
        %v1566 = vmul.f32 %v1546, %v483
        %v1567 = vmul.f32 %v1559, %v483
        %v1568 = vmul.f32 %v1388, %v1388
        %v1569 = vmul.f32 %v1389, %v1389
        %v1570 = vmul.f32 %v1390, %v1390
        %v1571 = vmul.f32 %v1391, %v1391
        %v1572 = vmul.f32 %v1392, %v1392
        %v1573 = vmul.f32 %v1393, %v1393
        %v1574 = vmul.f32 %v1394, %v1394
        %v1575 = vmul.f32 %v1395, %v1395
        %v1576 = vmul.f32 %v1396, %v1396
        %v1577 = vmul.f32 %v1397, %v1397
        %v1578 = vmul.f32 %v1398, %v1398
        %v1579 = vmul.f32 %v1399, %v1399
        %v1580 = vmul.f32 %v1400, %v1400
        %v1581 = vmul.f32 %v1401, %v1401
        %v1582 = vmul.f32 %v1402, %v1402
        %v1583 = vmul.f32 %v1403, %v1403
        %v1584 = vmul.f32 %v1404, %v1404
        %v1585 = vmul.f32 %v1405, %v1405
        %v1586 = vmul.f32 %v1406, %v1406
        %v1587 = vmul.f32 %v1407, %v1407
        %v1588 = vmul.f32 %v1408, %v1408
        %v1589 = vmul.f32 %v1409, %v1409
        %v1590 = vmul.f32 %v1410, %v1410
        %v1591 = vmul.f32 %v1411, %v1411
        %v1592 = vmul.f32 %v1412, %v1412
        %v1593 = vmul.f32 %v1413, %v1413
        %v1594 = vmul.f32 %v1414, %v1414
        %v1595 = vmul.f32 %v1415, %v1415
        %v1596 = vmul.f32 %v1416, %v1416
        %v1597 = vmul.f32 %v1417, %v1417
        %v1598 = vmul.f32 %v1418, %v1418
        %v1599 = vmul.f32 %v1419, %v1419
        %v1600 = vmul.f32 %v1420, %v1420
        %v1601 = vmul.f32 %v1421, %v1421
        %v1602 = vmul.f32 %v1422, %v1422
        %v1603 = vmul.f32 %v1423, %v1423
        %v1604 = vmul.f32 %v1424, %v1424
        %v1605 = vmul.f32 %v1425, %v1425
        %v1606 = vmul.f32 %v1426, %v1426
        %v1607 = vmul.f32 %v1427, %v1427
        %v1608 = vmul.f32 %v1428, %v1428
        %v1609 = vmul.f32 %v1429, %v1429
        %v1610 = vmul.f32 %v1430, %v1430
        %v1611 = vmul.f32 %v1431, %v1431
        %v1612 = vmul.f32 %v1432, %v1432
        %v1613 = vmul.f32 %v1433, %v1433
        %v1614 = vmul.f32 %v1434, %v1434
        %v1615 = vmul.f32 %v1435, %v1435
        %v1616 = vmul.f32 %v1436, %v1436
        %v1617 = vmul.f32 %v1437, %v1437
        %v1618 = vmul.f32 %v1438, %v1438
        %v1619 = vmul.f32 %v1439, %v1439
        %v1620 = vmul.f32 %v1440, %v1440
        %v1621 = vmul.f32 %v1441, %v1441
        %v1622 = vmul.f32 %v1442, %v1442
        %v1623 = vmul.f32 %v1443, %v1443
        %v1624 = vmul.f32 %v1444, %v1444
        %v1625 = vmul.f32 %v1445, %v1445
        %v1626 = vmul.f32 %v1446, %v1446
        %v1627 = vmul.f32 %v1447, %v1447
        %v1628 = vmul.f32 %v1448, %v1448
        %v1629 = vmul.f32 %v1449, %v1449
        %v1630 = vmul.f32 %v1450, %v1450
        %v1631 = vmul.f32 %v1451, %v1451
        %v1632 = vadd.f32 %v1568, %v1569
        %v1633 = vadd.f32 %v1632, %v1570
        %v1634 = vadd.f32 %v1633, %v1571
        %v1635 = vadd.f32 %v1634, %v1572
        %v1636 = vadd.f32 %v1635, %v1573
        %v1637 = vadd.f32 %v1636, %v1574
        %v1638 = vadd.f32 %v1637, %v1575
        %v1639 = vrot.slane %v1638, 4
        %v1640 = vadd.f32 %v1638, %v1639
        %v1641 = vrot.slane %v1640, 2
        %v1642 = vadd.f32 %v1640, %v1641
        %v1643 = vrot.slane %v1642, 1
        %v1644 = vadd.f32 %v1642, %v1643
        %v1645 = vadd.f32 %v1576, %v1577
        %v1646 = vadd.f32 %v1645, %v1578
        %v1647 = vadd.f32 %v1646, %v1579
        %v1648 = vadd.f32 %v1647, %v1580
        %v1649 = vadd.f32 %v1648, %v1581
        %v1650 = vadd.f32 %v1649, %v1582
        %v1651 = vadd.f32 %v1650, %v1583
        %v1652 = vrot.slane %v1651, 4
        %v1653 = vadd.f32 %v1651, %v1652
        %v1654 = vrot.slane %v1653, 2
        %v1655 = vadd.f32 %v1653, %v1654
        %v1656 = vrot.slane %v1655, 1
        %v1657 = vadd.f32 %v1655, %v1656
        %v1658 = vadd.f32 %v1584, %v1585
        %v1659 = vadd.f32 %v1658, %v1586
        %v1660 = vadd.f32 %v1659, %v1587
        %v1661 = vadd.f32 %v1660, %v1588
        %v1662 = vadd.f32 %v1661, %v1589
        %v1663 = vadd.f32 %v1662, %v1590
        %v1664 = vadd.f32 %v1663, %v1591
        %v1665 = vrot.slane %v1664, 4
        %v1666 = vadd.f32 %v1664, %v1665
        %v1667 = vrot.slane %v1666, 2
        %v1668 = vadd.f32 %v1666, %v1667
        %v1669 = vrot.slane %v1668, 1
        %v1670 = vadd.f32 %v1668, %v1669
        %v1671 = vadd.f32 %v1592, %v1593
        %v1672 = vadd.f32 %v1671, %v1594
        %v1673 = vadd.f32 %v1672, %v1595
        %v1674 = vadd.f32 %v1673, %v1596
        %v1675 = vadd.f32 %v1674, %v1597
        %v1676 = vadd.f32 %v1675, %v1598
        %v1677 = vadd.f32 %v1676, %v1599
        %v1678 = vrot.slane %v1677, 4
        %v1679 = vadd.f32 %v1677, %v1678
        %v1680 = vrot.slane %v1679, 2
        %v1681 = vadd.f32 %v1679, %v1680
        %v1682 = vrot.slane %v1681, 1
        %v1683 = vadd.f32 %v1681, %v1682
        %v1684 = vadd.f32 %v1600, %v1601
        %v1685 = vadd.f32 %v1684, %v1602
        %v1686 = vadd.f32 %v1685, %v1603
        %v1687 = vadd.f32 %v1686, %v1604
        %v1688 = vadd.f32 %v1687, %v1605
        %v1689 = vadd.f32 %v1688, %v1606
        %v1690 = vadd.f32 %v1689, %v1607
        %v1691 = vrot.slane %v1690, 4
        %v1692 = vadd.f32 %v1690, %v1691
        %v1693 = vrot.slane %v1692, 2
        %v1694 = vadd.f32 %v1692, %v1693
        %v1695 = vrot.slane %v1694, 1
        %v1696 = vadd.f32 %v1694, %v1695
        %v1697 = vadd.f32 %v1608, %v1609
        %v1698 = vadd.f32 %v1697, %v1610
        %v1699 = vadd.f32 %v1698, %v1611
        %v1700 = vadd.f32 %v1699, %v1612
        %v1701 = vadd.f32 %v1700, %v1613
        %v1702 = vadd.f32 %v1701, %v1614
        %v1703 = vadd.f32 %v1702, %v1615
        %v1704 = vrot.slane %v1703, 4
        %v1705 = vadd.f32 %v1703, %v1704
        %v1706 = vrot.slane %v1705, 2
        %v1707 = vadd.f32 %v1705, %v1706
        %v1708 = vrot.slane %v1707, 1
        %v1709 = vadd.f32 %v1707, %v1708
        %v1710 = vadd.f32 %v1616, %v1617
        %v1711 = vadd.f32 %v1710, %v1618
        %v1712 = vadd.f32 %v1711, %v1619
        %v1713 = vadd.f32 %v1712, %v1620
        %v1714 = vadd.f32 %v1713, %v1621
        %v1715 = vadd.f32 %v1714, %v1622
        %v1716 = vadd.f32 %v1715, %v1623
        %v1717 = vrot.slane %v1716, 4
        %v1718 = vadd.f32 %v1716, %v1717
        %v1719 = vrot.slane %v1718, 2
        %v1720 = vadd.f32 %v1718, %v1719
        %v1721 = vrot.slane %v1720, 1
        %v1722 = vadd.f32 %v1720, %v1721
        %v1723 = vadd.f32 %v1624, %v1625
        %v1724 = vadd.f32 %v1723, %v1626
        %v1725 = vadd.f32 %v1724, %v1627
        %v1726 = vadd.f32 %v1725, %v1628
        %v1727 = vadd.f32 %v1726, %v1629
        %v1728 = vadd.f32 %v1727, %v1630
        %v1729 = vadd.f32 %v1728, %v1631
        %v1730 = vrot.slane %v1729, 4
        %v1731 = vadd.f32 %v1729, %v1730
        %v1732 = vrot.slane %v1731, 2
        %v1733 = vadd.f32 %v1731, %v1732
        %v1734 = vrot.slane %v1733, 1
        %v1735 = vadd.f32 %v1733, %v1734
        %v1736 = vmul.f32 %v1644, %v483
        %v1737 = vmul.f32 %v1657, %v483
        %v1738 = vmul.f32 %v1670, %v483
        %v1739 = vmul.f32 %v1683, %v483
        %v1740 = vmul.f32 %v1696, %v483
        %v1741 = vmul.f32 %v1709, %v483
        %v1742 = vmul.f32 %v1722, %v483
        %v1743 = vmul.f32 %v1735, %v483
        %v1744 = vmul.f32 %v1560, %v1560
        %v1745 = vmul.f32 %v1561, %v1561
        %v1746 = vmul.f32 %v1562, %v1562
        %v1747 = vmul.f32 %v1563, %v1563
        %v1748 = vmul.f32 %v1564, %v1564
        %v1749 = vmul.f32 %v1565, %v1565
        %v1750 = vmul.f32 %v1566, %v1566
        %v1751 = vmul.f32 %v1567, %v1567
        %v1752 = vsub.f32 %v1736, %v1744
        %v1753 = vsub.f32 %v1737, %v1745
        %v1754 = vsub.f32 %v1738, %v1746
        %v1755 = vsub.f32 %v1739, %v1747
        %v1756 = vsub.f32 %v1740, %v1748
        %v1757 = vsub.f32 %v1741, %v1749
        %v1758 = vsub.f32 %v1742, %v1750
        %v1759 = vsub.f32 %v1743, %v1751
        %v1760 = vsel %vm685, %v1560, %v1454
        %v1761 = vsel %vm685, %v1561, %v1454
        %v1762 = vsel %vm685, %v1562, %v1454
        %v1763 = vsel %vm685, %v1563, %v1454
        %v1764 = vsel %vm685, %v1564, %v1454
        %v1765 = vsel %vm685, %v1565, %v1454
        %v1766 = vsel %vm685, %v1566, %v1454
        %v1767 = vsel %vm685, %v1567, %v1454
        %v1768 = vsel %vm685, %v1752, %v1455
        %v1769 = vsel %vm685, %v1753, %v1455
        %v1770 = vsel %vm685, %v1754, %v1455
        %v1771 = vsel %vm685, %v1755, %v1455
        %v1772 = vsel %vm685, %v1756, %v1455
        %v1773 = vsel %vm685, %v1757, %v1455
        %v1774 = vsel %vm685, %v1758, %v1455
        %v1775 = vsel %vm685, %v1759, %v1455
        %v1776 = vadd.f32 %v1768, 1e-05
        %v1777 = vadd.f32 %v1769, 1e-05
        %v1778 = vadd.f32 %v1770, 1e-05
        %v1779 = vadd.f32 %v1771, 1e-05
        %v1780 = vadd.f32 %v1772, 1e-05
        %v1781 = vadd.f32 %v1773, 1e-05
        %v1782 = vadd.f32 %v1774, 1e-05
        %v1783 = vadd.f32 %v1775, 1e-05
        %v1784 = vrsqrt.pop %v1776
        %v1785 = vrsqrt.pop %v1777
        %v1786 = vrsqrt.pop %v1778
        %v1787 = vrsqrt.pop %v1779
        %v1788 = vrsqrt.pop %v1780
        %v1789 = vrsqrt.pop %v1781
        %v1790 = vrsqrt.pop %v1782
        %v1791 = vrsqrt.pop %v1783
        %v1792 = vmul.f32 %v1452, %v1784
        %v1793 = vmul.f32 %v1452, %v1785
        %v1794 = vmul.f32 %v1452, %v1786
        %v1795 = vmul.f32 %v1452, %v1787
        %v1796 = vmul.f32 %v1452, %v1788
        %v1797 = vmul.f32 %v1452, %v1789
        %v1798 = vmul.f32 %v1452, %v1790
        %v1799 = vmul.f32 %v1452, %v1791
        %v1800 = vmul.f32 %v1760, %v1792
        %v1801 = vmul.f32 %v1761, %v1793
        %v1802 = vmul.f32 %v1762, %v1794
        %v1803 = vmul.f32 %v1763, %v1795
        %v1804 = vmul.f32 %v1764, %v1796
        %v1805 = vmul.f32 %v1765, %v1797
        %v1806 = vmul.f32 %v1766, %v1798
        %v1807 = vmul.f32 %v1767, %v1799
        %v1808 = vsub.f32 %v1453, %v1800
        %v1809 = vsub.f32 %v1453, %v1801
        %v1810 = vsub.f32 %v1453, %v1802
        %v1811 = vsub.f32 %v1453, %v1803
        %v1812 = vsub.f32 %v1453, %v1804
        %v1813 = vsub.f32 %v1453, %v1805
        %v1814 = vsub.f32 %v1453, %v1806
        %v1815 = vsub.f32 %v1453, %v1807
        %v1816 = vlaneseq
        %v1817 = vshrl.u32 %v1816, 7
        %v1818 = vsub.s32 0, %v1817
        %v1819 = vrot.slane %v1792, %v1818
        %v1820 = vlaneseq
        %v1821 = vshrl.u32 %v1820, 7
        %v1822 = vsub.s32 0, %v1821
        %v1823 = vrot.slane %v1793, %v1822
        %v1824 = vlaneseq
        %v1825 = vshrl.u32 %v1824, 7
        %v1826 = vsub.s32 0, %v1825
        %v1827 = vrot.slane %v1794, %v1826
        %v1828 = vlaneseq
        %v1829 = vshrl.u32 %v1828, 7
        %v1830 = vsub.s32 0, %v1829
        %v1831 = vrot.slane %v1795, %v1830
        %v1832 = vlaneseq
        %v1833 = vshrl.u32 %v1832, 7
        %v1834 = vsub.s32 0, %v1833
        %v1835 = vrot.slane %v1796, %v1834
        %v1836 = vlaneseq
        %v1837 = vshrl.u32 %v1836, 7
        %v1838 = vsub.s32 0, %v1837
        %v1839 = vrot.slane %v1797, %v1838
        %v1840 = vlaneseq
        %v1841 = vshrl.u32 %v1840, 7
        %v1842 = vsub.s32 0, %v1841
        %v1843 = vrot.slane %v1798, %v1842
        %v1844 = vlaneseq
        %v1845 = vshrl.u32 %v1844, 7
        %v1846 = vsub.s32 0, %v1845
        %v1847 = vrot.slane %v1799, %v1846
        %v1848 = vmul.f32 %v1388, %v1819
        %v1849 = vmul.f32 %v1389, %v1819
        %v1850 = vmul.f32 %v1390, %v1819
        %v1851 = vmul.f32 %v1391, %v1819
        %v1852 = vmul.f32 %v1392, %v1819
        %v1853 = vmul.f32 %v1393, %v1819
        %v1854 = vmul.f32 %v1394, %v1819
        %v1855 = vmul.f32 %v1395, %v1819
        %v1856 = vmul.f32 %v1396, %v1823
        %v1857 = vmul.f32 %v1397, %v1823
        %v1858 = vmul.f32 %v1398, %v1823
        %v1859 = vmul.f32 %v1399, %v1823
        %v1860 = vmul.f32 %v1400, %v1823
        %v1861 = vmul.f32 %v1401, %v1823
        %v1862 = vmul.f32 %v1402, %v1823
        %v1863 = vmul.f32 %v1403, %v1823
        %v1864 = vmul.f32 %v1404, %v1827
        %v1865 = vmul.f32 %v1405, %v1827
        %v1866 = vmul.f32 %v1406, %v1827
        %v1867 = vmul.f32 %v1407, %v1827
        %v1868 = vmul.f32 %v1408, %v1827
        %v1869 = vmul.f32 %v1409, %v1827
        %v1870 = vmul.f32 %v1410, %v1827
        %v1871 = vmul.f32 %v1411, %v1827
        %v1872 = vmul.f32 %v1412, %v1831
        %v1873 = vmul.f32 %v1413, %v1831
        %v1874 = vmul.f32 %v1414, %v1831
        %v1875 = vmul.f32 %v1415, %v1831
        %v1876 = vmul.f32 %v1416, %v1831
        %v1877 = vmul.f32 %v1417, %v1831
        %v1878 = vmul.f32 %v1418, %v1831
        %v1879 = vmul.f32 %v1419, %v1831
        %v1880 = vmul.f32 %v1420, %v1835
        %v1881 = vmul.f32 %v1421, %v1835
        %v1882 = vmul.f32 %v1422, %v1835
        %v1883 = vmul.f32 %v1423, %v1835
        %v1884 = vmul.f32 %v1424, %v1835
        %v1885 = vmul.f32 %v1425, %v1835
        %v1886 = vmul.f32 %v1426, %v1835
        %v1887 = vmul.f32 %v1427, %v1835
        %v1888 = vmul.f32 %v1428, %v1839
        %v1889 = vmul.f32 %v1429, %v1839
        %v1890 = vmul.f32 %v1430, %v1839
        %v1891 = vmul.f32 %v1431, %v1839
        %v1892 = vmul.f32 %v1432, %v1839
        %v1893 = vmul.f32 %v1433, %v1839
        %v1894 = vmul.f32 %v1434, %v1839
        %v1895 = vmul.f32 %v1435, %v1839
        %v1896 = vmul.f32 %v1436, %v1843
        %v1897 = vmul.f32 %v1437, %v1843
        %v1898 = vmul.f32 %v1438, %v1843
        %v1899 = vmul.f32 %v1439, %v1843
        %v1900 = vmul.f32 %v1440, %v1843
        %v1901 = vmul.f32 %v1441, %v1843
        %v1902 = vmul.f32 %v1442, %v1843
        %v1903 = vmul.f32 %v1443, %v1843
        %v1904 = vmul.f32 %v1444, %v1847
        %v1905 = vmul.f32 %v1445, %v1847
        %v1906 = vmul.f32 %v1446, %v1847
        %v1907 = vmul.f32 %v1447, %v1847
        %v1908 = vmul.f32 %v1448, %v1847
        %v1909 = vmul.f32 %v1449, %v1847
        %v1910 = vmul.f32 %v1450, %v1847
        %v1911 = vmul.f32 %v1451, %v1847
        %v1912 = vlaneseq
        %v1913 = vshrl.u32 %v1912, 7
        %v1914 = vsub.s32 0, %v1913
        %v1915 = vrot.slane %v1808, %v1914
        %v1916 = vlaneseq
        %v1917 = vshrl.u32 %v1916, 7
        %v1918 = vsub.s32 0, %v1917
        %v1919 = vrot.slane %v1809, %v1918
        %v1920 = vlaneseq
        %v1921 = vshrl.u32 %v1920, 7
        %v1922 = vsub.s32 0, %v1921
        %v1923 = vrot.slane %v1810, %v1922
        %v1924 = vlaneseq
        %v1925 = vshrl.u32 %v1924, 7
        %v1926 = vsub.s32 0, %v1925
        %v1927 = vrot.slane %v1811, %v1926
        %v1928 = vlaneseq
        %v1929 = vshrl.u32 %v1928, 7
        %v1930 = vsub.s32 0, %v1929
        %v1931 = vrot.slane %v1812, %v1930
        %v1932 = vlaneseq
        %v1933 = vshrl.u32 %v1932, 7
        %v1934 = vsub.s32 0, %v1933
        %v1935 = vrot.slane %v1813, %v1934
        %v1936 = vlaneseq
        %v1937 = vshrl.u32 %v1936, 7
        %v1938 = vsub.s32 0, %v1937
        %v1939 = vrot.slane %v1814, %v1938
        %v1940 = vlaneseq
        %v1941 = vshrl.u32 %v1940, 7
        %v1942 = vsub.s32 0, %v1941
        %v1943 = vrot.slane %v1815, %v1942
        %v1944 = vadd.f32 %v1848, %v1915
        %v1945 = vadd.f32 %v1849, %v1915
        %v1946 = vadd.f32 %v1850, %v1915
        %v1947 = vadd.f32 %v1851, %v1915
        %v1948 = vadd.f32 %v1852, %v1915
        %v1949 = vadd.f32 %v1853, %v1915
        %v1950 = vadd.f32 %v1854, %v1915
        %v1951 = vadd.f32 %v1855, %v1915
        %v1952 = vadd.f32 %v1856, %v1919
        %v1953 = vadd.f32 %v1857, %v1919
        %v1954 = vadd.f32 %v1858, %v1919
        %v1955 = vadd.f32 %v1859, %v1919
        %v1956 = vadd.f32 %v1860, %v1919
        %v1957 = vadd.f32 %v1861, %v1919
        %v1958 = vadd.f32 %v1862, %v1919
        %v1959 = vadd.f32 %v1863, %v1919
        %v1960 = vadd.f32 %v1864, %v1923
        %v1961 = vadd.f32 %v1865, %v1923
        %v1962 = vadd.f32 %v1866, %v1923
        %v1963 = vadd.f32 %v1867, %v1923
        %v1964 = vadd.f32 %v1868, %v1923
        %v1965 = vadd.f32 %v1869, %v1923
        %v1966 = vadd.f32 %v1870, %v1923
        %v1967 = vadd.f32 %v1871, %v1923
        %v1968 = vadd.f32 %v1872, %v1927
        %v1969 = vadd.f32 %v1873, %v1927
        %v1970 = vadd.f32 %v1874, %v1927
        %v1971 = vadd.f32 %v1875, %v1927
        %v1972 = vadd.f32 %v1876, %v1927
        %v1973 = vadd.f32 %v1877, %v1927
        %v1974 = vadd.f32 %v1878, %v1927
        %v1975 = vadd.f32 %v1879, %v1927
        %v1976 = vadd.f32 %v1880, %v1931
        %v1977 = vadd.f32 %v1881, %v1931
        %v1978 = vadd.f32 %v1882, %v1931
        %v1979 = vadd.f32 %v1883, %v1931
        %v1980 = vadd.f32 %v1884, %v1931
        %v1981 = vadd.f32 %v1885, %v1931
        %v1982 = vadd.f32 %v1886, %v1931
        %v1983 = vadd.f32 %v1887, %v1931
        %v1984 = vadd.f32 %v1888, %v1935
        %v1985 = vadd.f32 %v1889, %v1935
        %v1986 = vadd.f32 %v1890, %v1935
        %v1987 = vadd.f32 %v1891, %v1935
        %v1988 = vadd.f32 %v1892, %v1935
        %v1989 = vadd.f32 %v1893, %v1935
        %v1990 = vadd.f32 %v1894, %v1935
        %v1991 = vadd.f32 %v1895, %v1935
        %v1992 = vadd.f32 %v1896, %v1939
        %v1993 = vadd.f32 %v1897, %v1939
        %v1994 = vadd.f32 %v1898, %v1939
        %v1995 = vadd.f32 %v1899, %v1939
        %v1996 = vadd.f32 %v1900, %v1939
        %v1997 = vadd.f32 %v1901, %v1939
        %v1998 = vadd.f32 %v1902, %v1939
        %v1999 = vadd.f32 %v1903, %v1939
        %v2000 = vadd.f32 %v1904, %v1943
        %v2001 = vadd.f32 %v1905, %v1943
        %v2002 = vadd.f32 %v1906, %v1943
        %v2003 = vadd.f32 %v1907, %v1943
        %v2004 = vadd.f32 %v1908, %v1943
        %v2005 = vadd.f32 %v1909, %v1943
        %v2006 = vadd.f32 %v1910, %v1943
        %v2007 = vadd.f32 %v1911, %v1943
        %v2008 = vmax.f32 %v1944, 0.0
        %v2009 = vmax.f32 %v1945, 0.0
        %v2010 = vmax.f32 %v1946, 0.0
        %v2011 = vmax.f32 %v1947, 0.0
        %v2012 = vmax.f32 %v1948, 0.0
        %v2013 = vmax.f32 %v1949, 0.0
        %v2014 = vmax.f32 %v1950, 0.0
        %v2015 = vmax.f32 %v1951, 0.0
        %v2016 = vmax.f32 %v1952, 0.0
        %v2017 = vmax.f32 %v1953, 0.0
        %v2018 = vmax.f32 %v1954, 0.0
        %v2019 = vmax.f32 %v1955, 0.0
        %v2020 = vmax.f32 %v1956, 0.0
        %v2021 = vmax.f32 %v1957, 0.0
        %v2022 = vmax.f32 %v1958, 0.0
        %v2023 = vmax.f32 %v1959, 0.0
        %v2024 = vmax.f32 %v1960, 0.0
        %v2025 = vmax.f32 %v1961, 0.0
        %v2026 = vmax.f32 %v1962, 0.0
        %v2027 = vmax.f32 %v1963, 0.0
        %v2028 = vmax.f32 %v1964, 0.0
        %v2029 = vmax.f32 %v1965, 0.0
        %v2030 = vmax.f32 %v1966, 0.0
        %v2031 = vmax.f32 %v1967, 0.0
        %v2032 = vmax.f32 %v1968, 0.0
        %v2033 = vmax.f32 %v1969, 0.0
        %v2034 = vmax.f32 %v1970, 0.0
        %v2035 = vmax.f32 %v1971, 0.0
        %v2036 = vmax.f32 %v1972, 0.0
        %v2037 = vmax.f32 %v1973, 0.0
        %v2038 = vmax.f32 %v1974, 0.0
        %v2039 = vmax.f32 %v1975, 0.0
        %v2040 = vmax.f32 %v1976, 0.0
        %v2041 = vmax.f32 %v1977, 0.0
        %v2042 = vmax.f32 %v1978, 0.0
        %v2043 = vmax.f32 %v1979, 0.0
        %v2044 = vmax.f32 %v1980, 0.0
        %v2045 = vmax.f32 %v1981, 0.0
        %v2046 = vmax.f32 %v1982, 0.0
        %v2047 = vmax.f32 %v1983, 0.0
        %v2048 = vmax.f32 %v1984, 0.0
        %v2049 = vmax.f32 %v1985, 0.0
        %v2050 = vmax.f32 %v1986, 0.0
        %v2051 = vmax.f32 %v1987, 0.0
        %v2052 = vmax.f32 %v1988, 0.0
        %v2053 = vmax.f32 %v1989, 0.0
        %v2054 = vmax.f32 %v1990, 0.0
        %v2055 = vmax.f32 %v1991, 0.0
        %v2056 = vmax.f32 %v1992, 0.0
        %v2057 = vmax.f32 %v1993, 0.0
        %v2058 = vmax.f32 %v1994, 0.0
        %v2059 = vmax.f32 %v1995, 0.0
        %v2060 = vmax.f32 %v1996, 0.0
        %v2061 = vmax.f32 %v1997, 0.0
        %v2062 = vmax.f32 %v1998, 0.0
        %v2063 = vmax.f32 %v1999, 0.0
        %v2064 = vmax.f32 %v2000, 0.0
        %v2065 = vmax.f32 %v2001, 0.0
        %v2066 = vmax.f32 %v2002, 0.0
        %v2067 = vmax.f32 %v2003, 0.0
        %v2068 = vmax.f32 %v2004, 0.0
        %v2069 = vmax.f32 %v2005, 0.0
        %v2070 = vmax.f32 %v2006, 0.0
        %v2071 = vmax.f32 %v2007, 0.0
        %v2072 = vpack.c.bf16 %v2009, %v2008
        %v2073 = vpack.c.bf16 %v2011, %v2010
        %v2074 = vpack.c.bf16 %v2013, %v2012
        %v2075 = vpack.c.bf16 %v2015, %v2014
        %v2076 = vpack.c.bf16 %v2017, %v2016
        %v2077 = vpack.c.bf16 %v2019, %v2018
        %v2078 = vpack.c.bf16 %v2021, %v2020
        %v2079 = vpack.c.bf16 %v2023, %v2022
        %v2080 = vpack.c.bf16 %v2025, %v2024
        %v2081 = vpack.c.bf16 %v2027, %v2026
        %v2082 = vpack.c.bf16 %v2029, %v2028
        %v2083 = vpack.c.bf16 %v2031, %v2030
        %v2084 = vpack.c.bf16 %v2033, %v2032
        %v2085 = vpack.c.bf16 %v2035, %v2034
        %v2086 = vpack.c.bf16 %v2037, %v2036
        %v2087 = vpack.c.bf16 %v2039, %v2038
        %v2088 = vpack.c.bf16 %v2041, %v2040
        %v2089 = vpack.c.bf16 %v2043, %v2042
        %v2090 = vpack.c.bf16 %v2045, %v2044
        %v2091 = vpack.c.bf16 %v2047, %v2046
        %v2092 = vpack.c.bf16 %v2049, %v2048
        %v2093 = vpack.c.bf16 %v2051, %v2050
        %v2094 = vpack.c.bf16 %v2053, %v2052
        %v2095 = vpack.c.bf16 %v2055, %v2054
        %v2096 = vpack.c.bf16 %v2057, %v2056
        %v2097 = vpack.c.bf16 %v2059, %v2058
        %v2098 = vpack.c.bf16 %v2061, %v2060
        %v2099 = vpack.c.bf16 %v2063, %v2062
        %v2100 = vpack.c.bf16 %v2065, %v2064
        %v2101 = vpack.c.bf16 %v2067, %v2066
        %v2102 = vpack.c.bf16 %v2069, %v2068
        %v2103 = vpack.c.bf16 %v2071, %v2070
        %s2104 = scalar_lea.vmem %s2, 64
        %v2105 = vld [vmem:[%s2104] sm:$0xf]
        %v2106 = vld [vmem:[%s2104 + $0x4] sm:$0xf]
        %v2107 = vld [vmem:[%s2104 + $0x8] sm:$0xf]
        %v2108 = vld [vmem:[%s2104 + $0xc] sm:$0xf]
        %v2109 = vld [vmem:[%s2104 + $0x10] sm:$0xf]
        %v2110 = vld [vmem:[%s2104 + $0x14] sm:$0xf]
        %v2111 = vld [vmem:[%s2104 + $0x18] sm:$0xf]
        %v2112 = vld [vmem:[%s2104 + $0x1c] sm:$0xf]
        %v2113 = vld [vmem:[%s2104 + $0x20] sm:$0xf]
        %v2114 = vld [vmem:[%s2104 + $0x24] sm:$0xf]
        %v2115 = vld [vmem:[%s2104 + $0x28] sm:$0xf]
        %v2116 = vld [vmem:[%s2104 + $0x2c] sm:$0xf]
        %v2117 = vld [vmem:[%s2104 + $0x30] sm:$0xf]
        %v2118 = vld [vmem:[%s2104 + $0x34] sm:$0xf]
        %v2119 = vld [vmem:[%s2104 + $0x38] sm:$0xf]
        %v2120 = vld [vmem:[%s2104 + $0x3c] sm:$0xf]
        %v2137 = vunpack.c.l.b16 %v2105
        %v2138 = vunpack.c.l.b16 %v2106
        %v2139 = vunpack.c.l.b16 %v2107
        %v2140 = vunpack.c.l.b16 %v2108
        %v2141 = vunpack.c.l.b16 %v2109
        %v2142 = vunpack.c.l.b16 %v2110
        %v2143 = vunpack.c.l.b16 %v2111
        %v2144 = vunpack.c.l.b16 %v2112
        %v2145 = vunpack.c.l.b16 %v2113
        %v2146 = vunpack.c.l.b16 %v2114
        %v2147 = vunpack.c.l.b16 %v2115
        %v2148 = vunpack.c.l.b16 %v2116
        %v2149 = vunpack.c.l.b16 %v2117
        %v2150 = vunpack.c.l.b16 %v2118
        %v2151 = vunpack.c.l.b16 %v2119
        %v2152 = vunpack.c.l.b16 %v2120
        %v2153 = vpack.c.b16 %v2138, %v2137
        %v2154 = vpack.c.b16 %v2140, %v2139
        %v2155 = vpack.c.b16 %v2142, %v2141
        %v2156 = vpack.c.b16 %v2144, %v2143
        %v2157 = vpack.c.b16 %v2146, %v2145
        %v2158 = vpack.c.b16 %v2148, %v2147
        %v2159 = vpack.c.b16 %v2150, %v2149
        %v2160 = vpack.c.b16 %v2152, %v2151
        %2169 = vmatprep.subr.bf16.mxu0 0
        %2170 = vmatpush1.bf16.msra.mxu0 %v2160
        %2171 = vmatprep.subr.bf16.mxu0 0
        %2172 = vmatpush1.bf16.msra.mxu0 %v2159
        %2173 = vmatprep.subr.bf16.mxu0 0
        %2174 = vmatpush1.bf16.msra.mxu0 %v2158
        %2175 = vmatprep.subr.bf16.mxu0 0
        %2176 = vmatpush1.bf16.msra.mxu0 %v2157
        %2177 = vmatprep.subr.bf16.mxu0 0
        %2178 = vmatpush1.bf16.msra.mxu0 %v2156
        %2179 = vmatprep.subr.bf16.mxu0 0
        %2180 = vmatpush1.bf16.msra.mxu0 %v2155
        %2181 = vmatprep.subr.bf16.mxu0 0
        %2182 = vmatpush1.bf16.msra.mxu0 %v2154
        %2183 = vmatprep.subr.bf16.mxu0 0
        %2184 = vmatpush1.bf16.msra.mxu0 %v2153
        %2185 = vmatprep.subr.bf16.mxu0 0
        %2186 = vmatpush2.bf16.msra.mxu0 0
        %2187 = vmatprep.subr.bf16.mxu0 0
        %2188 = vmatpush2.bf16.msra.mxu0 0
        %2189 = vmatprep.subr.bf16.mxu0 0
        %2190 = vmatpush2.bf16.msra.mxu0 0
        %2191 = vmatprep.subr.bf16.mxu0 0
        %2192 = vmatpush2.bf16.msra.mxu0 0
        %2193 = vmatprep.subr.bf16.mxu0 0
        %2194 = vmatpush2.bf16.msra.mxu0 0
        %2195 = vmatprep.subr.bf16.mxu0 0
        %2196 = vmatpush2.bf16.msra.mxu0 0
        %2197 = vmatprep.subr.bf16.mxu0 0
        %2198 = vmatpush2.bf16.msra.mxu0 0
        %2199 = vmatprep.subr.bf16.mxu0 0
        %2200 = vmatpush2.bf16.msra.mxu0 0
        %2201 = vmatprep.mubr.bf16.mxu0 0
        %2202 = vmatmul.mubr.bf16.gmra.mxu0 %v2072
        %v2203 = vpop.f32.mrf.mxu0
        %v2204 = vadd.f32 0.0, %v2203
        %v2205 = vpop.f32.mrf.mxu0
        %v2206 = vpop.f32.mrf.mxu0
        %v2207 = vadd.f32 0.0, %v2206
        %v2208 = vpop.f32.mrf.mxu0
        %2209 = vmatprep.mubr.bf16.mxu0 0
        %2210 = vmatmul.mubr.bf16.gmra.mxu0 %v2073
        %v2211 = vpop.f32.mrf.mxu0
        %v2212 = vadd.f32 0.0, %v2211
        %v2213 = vpop.f32.mrf.mxu0
        %v2214 = vpop.f32.mrf.mxu0
        %v2215 = vadd.f32 0.0, %v2214
        %v2216 = vpop.f32.mrf.mxu0
        %2217 = vmatprep.mubr.bf16.mxu0 0
        %2218 = vmatmul.mubr.bf16.gmra.mxu0 %v2074
        %v2219 = vpop.f32.mrf.mxu0
        %v2220 = vadd.f32 0.0, %v2219
        %v2221 = vpop.f32.mrf.mxu0
        %v2222 = vpop.f32.mrf.mxu0
        %v2223 = vadd.f32 0.0, %v2222
        %v2224 = vpop.f32.mrf.mxu0
        %2225 = vmatprep.mubr.bf16.mxu0 0
        %2226 = vmatmul.mubr.bf16.gmra.mxu0 %v2075
        %v2227 = vpop.f32.mrf.mxu0
        %v2228 = vadd.f32 0.0, %v2227
        %v2229 = vpop.f32.mrf.mxu0
        %v2230 = vpop.f32.mrf.mxu0
        %v2231 = vadd.f32 0.0, %v2230
        %v2232 = vpop.f32.mrf.mxu0
        %2233 = vmatprep.mubr.bf16.mxu0 0
        %2234 = vmatmul.mubr.bf16.gmra.mxu0 %v2076
        %v2235 = vpop.f32.mrf.mxu0
        %v2236 = vadd.f32 0.0, %v2235
        %v2237 = vpop.f32.mrf.mxu0
        %v2238 = vpop.f32.mrf.mxu0
        %v2239 = vadd.f32 0.0, %v2238
        %v2240 = vpop.f32.mrf.mxu0
        %2241 = vmatprep.mubr.bf16.mxu0 0
        %2242 = vmatmul.mubr.bf16.gmra.mxu0 %v2077
        %v2243 = vpop.f32.mrf.mxu0
        %v2244 = vadd.f32 0.0, %v2243
        %v2245 = vpop.f32.mrf.mxu0
        %v2246 = vpop.f32.mrf.mxu0
        %v2247 = vadd.f32 0.0, %v2246
        %v2248 = vpop.f32.mrf.mxu0
        %2249 = vmatprep.mubr.bf16.mxu0 0
        %2250 = vmatmul.mubr.bf16.gmra.mxu0 %v2078
        %v2251 = vpop.f32.mrf.mxu0
        %v2252 = vadd.f32 0.0, %v2251
        %v2253 = vpop.f32.mrf.mxu0
        %v2254 = vpop.f32.mrf.mxu0
        %v2255 = vadd.f32 0.0, %v2254
        %v2256 = vpop.f32.mrf.mxu0
        %2257 = vmatprep.mubr.bf16.mxu0 0
        %2258 = vmatmul.mubr.bf16.gmra.mxu0 %v2079
        %v2259 = vpop.f32.mrf.mxu0
        %v2260 = vadd.f32 0.0, %v2259
        %v2261 = vpop.f32.mrf.mxu0
        %v2262 = vpop.f32.mrf.mxu0
        %v2263 = vadd.f32 0.0, %v2262
        %v2264 = vpop.f32.mrf.mxu0
        %2265 = vmatprep.mubr.bf16.mxu0 0
        %2266 = vmatmul.mubr.bf16.gmra.mxu0 %v2080
        %v2267 = vpop.f32.mrf.mxu0
        %v2268 = vadd.f32 0.0, %v2267
        %v2269 = vpop.f32.mrf.mxu0
        %v2270 = vpop.f32.mrf.mxu0
        %v2271 = vadd.f32 0.0, %v2270
        %v2272 = vpop.f32.mrf.mxu0
        %2273 = vmatprep.mubr.bf16.mxu0 0
        %2274 = vmatmul.mubr.bf16.gmra.mxu0 %v2081
        %v2275 = vpop.f32.mrf.mxu0
        %v2276 = vadd.f32 0.0, %v2275
        %v2277 = vpop.f32.mrf.mxu0
        %v2278 = vpop.f32.mrf.mxu0
        %v2279 = vadd.f32 0.0, %v2278
        %v2280 = vpop.f32.mrf.mxu0
        %2281 = vmatprep.mubr.bf16.mxu0 0
        %2282 = vmatmul.mubr.bf16.gmra.mxu0 %v2082
        %v2283 = vpop.f32.mrf.mxu0
        %v2284 = vadd.f32 0.0, %v2283
        %v2285 = vpop.f32.mrf.mxu0
        %v2286 = vpop.f32.mrf.mxu0
        %v2287 = vadd.f32 0.0, %v2286
        %v2288 = vpop.f32.mrf.mxu0
        %2289 = vmatprep.mubr.bf16.mxu0 0
        %2290 = vmatmul.mubr.bf16.gmra.mxu0 %v2083
        %v2291 = vpop.f32.mrf.mxu0
        %v2292 = vadd.f32 0.0, %v2291
        %v2293 = vpop.f32.mrf.mxu0
        %v2294 = vpop.f32.mrf.mxu0
        %v2295 = vadd.f32 0.0, %v2294
        %v2296 = vpop.f32.mrf.mxu0
        %2297 = vmatprep.mubr.bf16.mxu0 0
        %2298 = vmatmul.mubr.bf16.gmra.mxu0 %v2084
        %v2299 = vpop.f32.mrf.mxu0
        %v2300 = vadd.f32 0.0, %v2299
        %v2301 = vpop.f32.mrf.mxu0
        %v2302 = vpop.f32.mrf.mxu0
        %v2303 = vadd.f32 0.0, %v2302
        %v2304 = vpop.f32.mrf.mxu0
        %2305 = vmatprep.mubr.bf16.mxu0 0
        %2306 = vmatmul.mubr.bf16.gmra.mxu0 %v2085
        %v2307 = vpop.f32.mrf.mxu0
        %v2308 = vadd.f32 0.0, %v2307
        %v2309 = vpop.f32.mrf.mxu0
        %v2310 = vpop.f32.mrf.mxu0
        %v2311 = vadd.f32 0.0, %v2310
        %v2312 = vpop.f32.mrf.mxu0
        %2313 = vmatprep.mubr.bf16.mxu0 0
        %2314 = vmatmul.mubr.bf16.gmra.mxu0 %v2086
        %v2315 = vpop.f32.mrf.mxu0
        %v2316 = vadd.f32 0.0, %v2315
        %v2317 = vpop.f32.mrf.mxu0
        %v2318 = vpop.f32.mrf.mxu0
        %v2319 = vadd.f32 0.0, %v2318
        %v2320 = vpop.f32.mrf.mxu0
        %2321 = vmatprep.mubr.bf16.mxu0 0
        %2322 = vmatmul.mubr.bf16.gmra.mxu0 %v2087
        %v2323 = vpop.f32.mrf.mxu0
        %v2324 = vadd.f32 0.0, %v2323
        %v2325 = vpop.f32.mrf.mxu0
        %v2326 = vpop.f32.mrf.mxu0
        %v2327 = vadd.f32 0.0, %v2326
        %v2328 = vpop.f32.mrf.mxu0
        %2329 = vmatprep.mubr.bf16.mxu0 0
        %2330 = vmatmul.mubr.bf16.gmra.mxu0 %v2088
        %v2331 = vpop.f32.mrf.mxu0
        %v2332 = vadd.f32 0.0, %v2331
        %v2333 = vpop.f32.mrf.mxu0
        %v2334 = vpop.f32.mrf.mxu0
        %v2335 = vadd.f32 0.0, %v2334
        %v2336 = vpop.f32.mrf.mxu0
        %2337 = vmatprep.mubr.bf16.mxu0 0
        %2338 = vmatmul.mubr.bf16.gmra.mxu0 %v2089
        %v2339 = vpop.f32.mrf.mxu0
        %v2340 = vadd.f32 0.0, %v2339
        %v2341 = vpop.f32.mrf.mxu0
        %v2342 = vpop.f32.mrf.mxu0
        %v2343 = vadd.f32 0.0, %v2342
        %v2344 = vpop.f32.mrf.mxu0
        %2345 = vmatprep.mubr.bf16.mxu0 0
        %2346 = vmatmul.mubr.bf16.gmra.mxu0 %v2090
        %v2347 = vpop.f32.mrf.mxu0
        %v2348 = vadd.f32 0.0, %v2347
        %v2349 = vpop.f32.mrf.mxu0
        %v2350 = vpop.f32.mrf.mxu0
        %v2351 = vadd.f32 0.0, %v2350
        %v2352 = vpop.f32.mrf.mxu0
        %2353 = vmatprep.mubr.bf16.mxu0 0
        %2354 = vmatmul.mubr.bf16.gmra.mxu0 %v2091
        %v2355 = vpop.f32.mrf.mxu0
        %v2356 = vadd.f32 0.0, %v2355
        %v2357 = vpop.f32.mrf.mxu0
        %v2358 = vpop.f32.mrf.mxu0
        %v2359 = vadd.f32 0.0, %v2358
        %v2360 = vpop.f32.mrf.mxu0
        %2361 = vmatprep.mubr.bf16.mxu0 0
        %2362 = vmatmul.mubr.bf16.gmra.mxu0 %v2092
        %v2363 = vpop.f32.mrf.mxu0
        %v2364 = vadd.f32 0.0, %v2363
        %v2365 = vpop.f32.mrf.mxu0
        %v2366 = vpop.f32.mrf.mxu0
        %v2367 = vadd.f32 0.0, %v2366
        %v2368 = vpop.f32.mrf.mxu0
        %2369 = vmatprep.mubr.bf16.mxu0 0
        %2370 = vmatmul.mubr.bf16.gmra.mxu0 %v2093
        %v2371 = vpop.f32.mrf.mxu0
        %v2372 = vadd.f32 0.0, %v2371
        %v2373 = vpop.f32.mrf.mxu0
        %v2374 = vpop.f32.mrf.mxu0
        %v2375 = vadd.f32 0.0, %v2374
        %v2376 = vpop.f32.mrf.mxu0
        %2377 = vmatprep.mubr.bf16.mxu0 0
        %2378 = vmatmul.mubr.bf16.gmra.mxu0 %v2094
        %v2379 = vpop.f32.mrf.mxu0
        %v2380 = vadd.f32 0.0, %v2379
        %v2381 = vpop.f32.mrf.mxu0
        %v2382 = vpop.f32.mrf.mxu0
        %v2383 = vadd.f32 0.0, %v2382
        %v2384 = vpop.f32.mrf.mxu0
        %2385 = vmatprep.mubr.bf16.mxu0 0
        %2386 = vmatmul.mubr.bf16.gmra.mxu0 %v2095
        %v2387 = vpop.f32.mrf.mxu0
        %v2388 = vadd.f32 0.0, %v2387
        %v2389 = vpop.f32.mrf.mxu0
        %v2390 = vpop.f32.mrf.mxu0
        %v2391 = vadd.f32 0.0, %v2390
        %v2392 = vpop.f32.mrf.mxu0
        %2393 = vmatprep.mubr.bf16.mxu0 0
        %2394 = vmatmul.mubr.bf16.gmra.mxu0 %v2096
        %v2395 = vpop.f32.mrf.mxu0
        %v2396 = vadd.f32 0.0, %v2395
        %v2397 = vpop.f32.mrf.mxu0
        %v2398 = vpop.f32.mrf.mxu0
        %v2399 = vadd.f32 0.0, %v2398
        %v2400 = vpop.f32.mrf.mxu0
        %2401 = vmatprep.mubr.bf16.mxu0 0
        %2402 = vmatmul.mubr.bf16.gmra.mxu0 %v2097
        %v2403 = vpop.f32.mrf.mxu0
        %v2404 = vadd.f32 0.0, %v2403
        %v2405 = vpop.f32.mrf.mxu0
        %v2406 = vpop.f32.mrf.mxu0
        %v2407 = vadd.f32 0.0, %v2406
        %v2408 = vpop.f32.mrf.mxu0
        %2409 = vmatprep.mubr.bf16.mxu0 0
        %2410 = vmatmul.mubr.bf16.gmra.mxu0 %v2098
        %v2411 = vpop.f32.mrf.mxu0
        %v2412 = vadd.f32 0.0, %v2411
        %v2413 = vpop.f32.mrf.mxu0
        %v2414 = vpop.f32.mrf.mxu0
        %v2415 = vadd.f32 0.0, %v2414
        %v2416 = vpop.f32.mrf.mxu0
        %2417 = vmatprep.mubr.bf16.mxu0 0
        %2418 = vmatmul.mubr.bf16.gmra.mxu0 %v2099
        %v2419 = vpop.f32.mrf.mxu0
        %v2420 = vadd.f32 0.0, %v2419
        %v2421 = vpop.f32.mrf.mxu0
        %v2422 = vpop.f32.mrf.mxu0
        %v2423 = vadd.f32 0.0, %v2422
        %v2424 = vpop.f32.mrf.mxu0
        %2425 = vmatprep.mubr.bf16.mxu0 0
        %2426 = vmatmul.mubr.bf16.gmra.mxu0 %v2100
        %v2427 = vpop.f32.mrf.mxu0
        %v2428 = vadd.f32 0.0, %v2427
        %v2429 = vpop.f32.mrf.mxu0
        %v2430 = vpop.f32.mrf.mxu0
        %v2431 = vadd.f32 0.0, %v2430
        %v2432 = vpop.f32.mrf.mxu0
        %2433 = vmatprep.mubr.bf16.mxu0 0
        %2434 = vmatmul.mubr.bf16.gmra.mxu0 %v2101
        %v2435 = vpop.f32.mrf.mxu0
        %v2436 = vadd.f32 0.0, %v2435
        %v2437 = vpop.f32.mrf.mxu0
        %v2438 = vpop.f32.mrf.mxu0
        %v2439 = vadd.f32 0.0, %v2438
        %v2440 = vpop.f32.mrf.mxu0
        %2441 = vmatprep.mubr.bf16.mxu0 0
        %2442 = vmatmul.mubr.bf16.gmra.mxu0 %v2102
        %v2443 = vpop.f32.mrf.mxu0
        %v2444 = vadd.f32 0.0, %v2443
        %v2445 = vpop.f32.mrf.mxu0
        %v2446 = vpop.f32.mrf.mxu0
        %v2447 = vadd.f32 0.0, %v2446
        %v2448 = vpop.f32.mrf.mxu0
        %2449 = vmatprep.mubr.bf16.mxu0 0
        %2450 = vmatmul.mubr.bf16.gmra.mxu0 %v2103
        %v2451 = vpop.f32.mrf.mxu0
        %v2452 = vadd.f32 0.0, %v2451
        %v2453 = vpop.f32.mrf.mxu0
        %v2454 = vpop.f32.mrf.mxu0
        %v2455 = vadd.f32 0.0, %v2454
        %v2456 = vpop.f32.mrf.mxu0
        %2457 = vdwg.mxu0
        %v2458 = vld [vmem:[%s1 + $0xa] sm:$0x1]
        %v2459 = vlaneseq
        %v2460 = vshrl.u32 %v2459, 7
        %v2461 = vsub.s32 0, %v2460
        %v2462 = vrot.slane %v2458, %v2461
        %v2463 = vadd.f32 %v2204, %v2462
        %v2464 = vadd.f32 %v2207, %v2462
        %v2465 = vadd.f32 %v2212, %v2462
        %v2466 = vadd.f32 %v2215, %v2462
        %v2467 = vadd.f32 %v2220, %v2462
        %v2468 = vadd.f32 %v2223, %v2462
        %v2469 = vadd.f32 %v2228, %v2462
        %v2470 = vadd.f32 %v2231, %v2462
        %v2471 = vadd.f32 %v2236, %v2462
        %v2472 = vadd.f32 %v2239, %v2462
        %v2473 = vadd.f32 %v2244, %v2462
        %v2474 = vadd.f32 %v2247, %v2462
        %v2475 = vadd.f32 %v2252, %v2462
        %v2476 = vadd.f32 %v2255, %v2462
        %v2477 = vadd.f32 %v2260, %v2462
        %v2478 = vadd.f32 %v2263, %v2462
        %v2479 = vadd.f32 %v2268, %v2462
        %v2480 = vadd.f32 %v2271, %v2462
        %v2481 = vadd.f32 %v2276, %v2462
        %v2482 = vadd.f32 %v2279, %v2462
        %v2483 = vadd.f32 %v2284, %v2462
        %v2484 = vadd.f32 %v2287, %v2462
        %v2485 = vadd.f32 %v2292, %v2462
        %v2486 = vadd.f32 %v2295, %v2462
        %v2487 = vadd.f32 %v2300, %v2462
        %v2488 = vadd.f32 %v2303, %v2462
        %v2489 = vadd.f32 %v2308, %v2462
        %v2490 = vadd.f32 %v2311, %v2462
        %v2491 = vadd.f32 %v2316, %v2462
        %v2492 = vadd.f32 %v2319, %v2462
        %v2493 = vadd.f32 %v2324, %v2462
        %v2494 = vadd.f32 %v2327, %v2462
        %v2495 = vadd.f32 %v2332, %v2462
        %v2496 = vadd.f32 %v2335, %v2462
        %v2497 = vadd.f32 %v2340, %v2462
        %v2498 = vadd.f32 %v2343, %v2462
        %v2499 = vadd.f32 %v2348, %v2462
        %v2500 = vadd.f32 %v2351, %v2462
        %v2501 = vadd.f32 %v2356, %v2462
        %v2502 = vadd.f32 %v2359, %v2462
        %v2503 = vadd.f32 %v2364, %v2462
        %v2504 = vadd.f32 %v2367, %v2462
        %v2505 = vadd.f32 %v2372, %v2462
        %v2506 = vadd.f32 %v2375, %v2462
        %v2507 = vadd.f32 %v2380, %v2462
        %v2508 = vadd.f32 %v2383, %v2462
        %v2509 = vadd.f32 %v2388, %v2462
        %v2510 = vadd.f32 %v2391, %v2462
        %v2511 = vadd.f32 %v2396, %v2462
        %v2512 = vadd.f32 %v2399, %v2462
        %v2513 = vadd.f32 %v2404, %v2462
        %v2514 = vadd.f32 %v2407, %v2462
        %v2515 = vadd.f32 %v2412, %v2462
        %v2516 = vadd.f32 %v2415, %v2462
        %v2517 = vadd.f32 %v2420, %v2462
        %v2518 = vadd.f32 %v2423, %v2462
        %v2519 = vadd.f32 %v2428, %v2462
        %v2520 = vadd.f32 %v2431, %v2462
        %v2521 = vadd.f32 %v2436, %v2462
        %v2522 = vadd.f32 %v2439, %v2462
        %v2523 = vadd.f32 %v2444, %v2462
        %v2524 = vadd.f32 %v2447, %v2462
        %v2525 = vadd.f32 %v2452, %v2462
        %v2526 = vadd.f32 %v2455, %v2462
        %v2527 = vadd.f32 %v2463, %v934
        %v2528 = vadd.f32 %v2464, %v935
        %v2529 = vadd.f32 %v2465, %v936
        %v2530 = vadd.f32 %v2466, %v937
        %v2531 = vadd.f32 %v2467, %v938
        %v2532 = vadd.f32 %v2468, %v939
        %v2533 = vadd.f32 %v2469, %v940
        %v2534 = vadd.f32 %v2470, %v941
        %v2535 = vadd.f32 %v2471, %v942
        %v2536 = vadd.f32 %v2472, %v943
        %v2537 = vadd.f32 %v2473, %v944
        %v2538 = vadd.f32 %v2474, %v945
        %v2539 = vadd.f32 %v2475, %v946
        %v2540 = vadd.f32 %v2476, %v947
        %v2541 = vadd.f32 %v2477, %v948
        %v2542 = vadd.f32 %v2478, %v949
        %v2543 = vadd.f32 %v2479, %v950
        %v2544 = vadd.f32 %v2480, %v951
        %v2545 = vadd.f32 %v2481, %v952
        %v2546 = vadd.f32 %v2482, %v953
        %v2547 = vadd.f32 %v2483, %v954
        %v2548 = vadd.f32 %v2484, %v955
        %v2549 = vadd.f32 %v2485, %v956
        %v2550 = vadd.f32 %v2486, %v957
        %v2551 = vadd.f32 %v2487, %v958
        %v2552 = vadd.f32 %v2488, %v959
        %v2553 = vadd.f32 %v2489, %v960
        %v2554 = vadd.f32 %v2490, %v961
        %v2555 = vadd.f32 %v2491, %v962
        %v2556 = vadd.f32 %v2492, %v963
        %v2557 = vadd.f32 %v2493, %v964
        %v2558 = vadd.f32 %v2494, %v965
        %v2559 = vadd.f32 %v2495, %v966
        %v2560 = vadd.f32 %v2496, %v967
        %v2561 = vadd.f32 %v2497, %v968
        %v2562 = vadd.f32 %v2498, %v969
        %v2563 = vadd.f32 %v2499, %v970
        %v2564 = vadd.f32 %v2500, %v971
        %v2565 = vadd.f32 %v2501, %v972
        %v2566 = vadd.f32 %v2502, %v973
        %v2567 = vadd.f32 %v2503, %v974
        %v2568 = vadd.f32 %v2504, %v975
        %v2569 = vadd.f32 %v2505, %v976
        %v2570 = vadd.f32 %v2506, %v977
        %v2571 = vadd.f32 %v2507, %v978
        %v2572 = vadd.f32 %v2508, %v979
        %v2573 = vadd.f32 %v2509, %v980
        %v2574 = vadd.f32 %v2510, %v981
        %v2575 = vadd.f32 %v2511, %v982
        %v2576 = vadd.f32 %v2512, %v983
        %v2577 = vadd.f32 %v2513, %v984
        %v2578 = vadd.f32 %v2514, %v985
        %v2579 = vadd.f32 %v2515, %v986
        %v2580 = vadd.f32 %v2516, %v987
        %v2581 = vadd.f32 %v2517, %v988
        %v2582 = vadd.f32 %v2518, %v989
        %v2583 = vadd.f32 %v2519, %v990
        %v2584 = vadd.f32 %v2520, %v991
        %v2585 = vadd.f32 %v2521, %v992
        %v2586 = vadd.f32 %v2522, %v993
        %v2587 = vadd.f32 %v2523, %v994
        %v2588 = vadd.f32 %v2524, %v995
        %v2589 = vadd.f32 %v2525, %v996
        %v2590 = vadd.f32 %v2526, %v997
        %v2591 = vmax.f32 %v2527, 0.0
        %v2592 = vmax.f32 %v2528, 0.0
        %v2593 = vmax.f32 %v2529, 0.0
        %v2594 = vmax.f32 %v2530, 0.0
        %v2595 = vmax.f32 %v2531, 0.0
        %v2596 = vmax.f32 %v2532, 0.0
        %v2597 = vmax.f32 %v2533, 0.0
        %v2598 = vmax.f32 %v2534, 0.0
        %v2599 = vmax.f32 %v2535, 0.0
        %v2600 = vmax.f32 %v2536, 0.0
        %v2601 = vmax.f32 %v2537, 0.0
        %v2602 = vmax.f32 %v2538, 0.0
        %v2603 = vmax.f32 %v2539, 0.0
        %v2604 = vmax.f32 %v2540, 0.0
        %v2605 = vmax.f32 %v2541, 0.0
        %v2606 = vmax.f32 %v2542, 0.0
        %v2607 = vmax.f32 %v2543, 0.0
        %v2608 = vmax.f32 %v2544, 0.0
        %v2609 = vmax.f32 %v2545, 0.0
        %v2610 = vmax.f32 %v2546, 0.0
        %v2611 = vmax.f32 %v2547, 0.0
        %v2612 = vmax.f32 %v2548, 0.0
        %v2613 = vmax.f32 %v2549, 0.0
        %v2614 = vmax.f32 %v2550, 0.0
        %v2615 = vmax.f32 %v2551, 0.0
        %v2616 = vmax.f32 %v2552, 0.0
        %v2617 = vmax.f32 %v2553, 0.0
        %v2618 = vmax.f32 %v2554, 0.0
        %v2619 = vmax.f32 %v2555, 0.0
        %v2620 = vmax.f32 %v2556, 0.0
        %v2621 = vmax.f32 %v2557, 0.0
        %v2622 = vmax.f32 %v2558, 0.0
        %v2623 = vmax.f32 %v2559, 0.0
        %v2624 = vmax.f32 %v2560, 0.0
        %v2625 = vmax.f32 %v2561, 0.0
        %v2626 = vmax.f32 %v2562, 0.0
        %v2627 = vmax.f32 %v2563, 0.0
        %v2628 = vmax.f32 %v2564, 0.0
        %v2629 = vmax.f32 %v2565, 0.0
        %v2630 = vmax.f32 %v2566, 0.0
        %v2631 = vmax.f32 %v2567, 0.0
        %v2632 = vmax.f32 %v2568, 0.0
        %v2633 = vmax.f32 %v2569, 0.0
        %v2634 = vmax.f32 %v2570, 0.0
        %v2635 = vmax.f32 %v2571, 0.0
        %v2636 = vmax.f32 %v2572, 0.0
        %v2637 = vmax.f32 %v2573, 0.0
        %v2638 = vmax.f32 %v2574, 0.0
        %v2639 = vmax.f32 %v2575, 0.0
        %v2640 = vmax.f32 %v2576, 0.0
        %v2641 = vmax.f32 %v2577, 0.0
        %v2642 = vmax.f32 %v2578, 0.0
        %v2643 = vmax.f32 %v2579, 0.0
        %v2644 = vmax.f32 %v2580, 0.0
        %v2645 = vmax.f32 %v2581, 0.0
        %v2646 = vmax.f32 %v2582, 0.0
        %v2647 = vmax.f32 %v2583, 0.0
        %v2648 = vmax.f32 %v2584, 0.0
        %v2649 = vmax.f32 %v2585, 0.0
        %v2650 = vmax.f32 %v2586, 0.0
        %v2651 = vmax.f32 %v2587, 0.0
        %v2652 = vmax.f32 %v2588, 0.0
        %v2653 = vmax.f32 %v2589, 0.0
        %v2654 = vmax.f32 %v2590, 0.0
        %v2655 = vadd.f32 %v2591, %v2592
        %v2656 = vadd.f32 %v2655, %v2593
        %v2657 = vadd.f32 %v2656, %v2594
        %v2658 = vadd.f32 %v2657, %v2595
        %v2659 = vadd.f32 %v2658, %v2596
        %v2660 = vadd.f32 %v2659, %v2597
        %v2661 = vadd.f32 %v2660, %v2598
        %v2662 = vrot.slane %v2661, 4
        %v2663 = vadd.f32 %v2661, %v2662
        %v2664 = vrot.slane %v2663, 2
        %v2665 = vadd.f32 %v2663, %v2664
        %v2666 = vrot.slane %v2665, 1
        %v2667 = vadd.f32 %v2665, %v2666
        %v2668 = vadd.f32 %v2599, %v2600
        %v2669 = vadd.f32 %v2668, %v2601
        %v2670 = vadd.f32 %v2669, %v2602
        %v2671 = vadd.f32 %v2670, %v2603
        %v2672 = vadd.f32 %v2671, %v2604
        %v2673 = vadd.f32 %v2672, %v2605
        %v2674 = vadd.f32 %v2673, %v2606
        %v2675 = vrot.slane %v2674, 4
        %v2676 = vadd.f32 %v2674, %v2675
        %v2677 = vrot.slane %v2676, 2
        %v2678 = vadd.f32 %v2676, %v2677
        %v2679 = vrot.slane %v2678, 1
        %v2680 = vadd.f32 %v2678, %v2679
        %v2681 = vadd.f32 %v2607, %v2608
        %v2682 = vadd.f32 %v2681, %v2609
        %v2683 = vadd.f32 %v2682, %v2610
        %v2684 = vadd.f32 %v2683, %v2611
        %v2685 = vadd.f32 %v2684, %v2612
        %v2686 = vadd.f32 %v2685, %v2613
        %v2687 = vadd.f32 %v2686, %v2614
        %v2688 = vrot.slane %v2687, 4
        %v2689 = vadd.f32 %v2687, %v2688
        %v2690 = vrot.slane %v2689, 2
        %v2691 = vadd.f32 %v2689, %v2690
        %v2692 = vrot.slane %v2691, 1
        %v2693 = vadd.f32 %v2691, %v2692
        %v2694 = vadd.f32 %v2615, %v2616
        %v2695 = vadd.f32 %v2694, %v2617
        %v2696 = vadd.f32 %v2695, %v2618
        %v2697 = vadd.f32 %v2696, %v2619
        %v2698 = vadd.f32 %v2697, %v2620
        %v2699 = vadd.f32 %v2698, %v2621
        %v2700 = vadd.f32 %v2699, %v2622
        %v2701 = vrot.slane %v2700, 4
        %v2702 = vadd.f32 %v2700, %v2701
        %v2703 = vrot.slane %v2702, 2
        %v2704 = vadd.f32 %v2702, %v2703
        %v2705 = vrot.slane %v2704, 1
        %v2706 = vadd.f32 %v2704, %v2705
        %v2707 = vadd.f32 %v2623, %v2624
        %v2708 = vadd.f32 %v2707, %v2625
        %v2709 = vadd.f32 %v2708, %v2626
        %v2710 = vadd.f32 %v2709, %v2627
        %v2711 = vadd.f32 %v2710, %v2628
        %v2712 = vadd.f32 %v2711, %v2629
        %v2713 = vadd.f32 %v2712, %v2630
        %v2714 = vrot.slane %v2713, 4
        %v2715 = vadd.f32 %v2713, %v2714
        %v2716 = vrot.slane %v2715, 2
        %v2717 = vadd.f32 %v2715, %v2716
        %v2718 = vrot.slane %v2717, 1
        %v2719 = vadd.f32 %v2717, %v2718
        %v2720 = vadd.f32 %v2631, %v2632
        %v2721 = vadd.f32 %v2720, %v2633
        %v2722 = vadd.f32 %v2721, %v2634
        %v2723 = vadd.f32 %v2722, %v2635
        %v2724 = vadd.f32 %v2723, %v2636
        %v2725 = vadd.f32 %v2724, %v2637
        %v2726 = vadd.f32 %v2725, %v2638
        %v2727 = vrot.slane %v2726, 4
        %v2728 = vadd.f32 %v2726, %v2727
        %v2729 = vrot.slane %v2728, 2
        %v2730 = vadd.f32 %v2728, %v2729
        %v2731 = vrot.slane %v2730, 1
        %v2732 = vadd.f32 %v2730, %v2731
        %v2733 = vadd.f32 %v2639, %v2640
        %v2734 = vadd.f32 %v2733, %v2641
        %v2735 = vadd.f32 %v2734, %v2642
        %v2736 = vadd.f32 %v2735, %v2643
        %v2737 = vadd.f32 %v2736, %v2644
        %v2738 = vadd.f32 %v2737, %v2645
        %v2739 = vadd.f32 %v2738, %v2646
        %v2740 = vrot.slane %v2739, 4
        %v2741 = vadd.f32 %v2739, %v2740
        %v2742 = vrot.slane %v2741, 2
        %v2743 = vadd.f32 %v2741, %v2742
        %v2744 = vrot.slane %v2743, 1
        %v2745 = vadd.f32 %v2743, %v2744
        %v2746 = vadd.f32 %v2647, %v2648
        %v2747 = vadd.f32 %v2746, %v2649
        %v2748 = vadd.f32 %v2747, %v2650
        %v2749 = vadd.f32 %v2748, %v2651
        %v2750 = vadd.f32 %v2749, %v2652
        %v2751 = vadd.f32 %v2750, %v2653
        %v2752 = vadd.f32 %v2751, %v2654
        %v2753 = vrot.slane %v2752, 4
        %v2754 = vadd.f32 %v2752, %v2753
        %v2755 = vrot.slane %v2754, 2
        %v2756 = vadd.f32 %v2754, %v2755
        %v2757 = vrot.slane %v2756, 1
        %v2758 = vadd.f32 %v2756, %v2757
        %v2759 = vmul.f32 %v2667, %v483
        %v2760 = vmul.f32 %v2680, %v483
        %v2761 = vmul.f32 %v2693, %v483
        %v2762 = vmul.f32 %v2706, %v483
        %v2763 = vmul.f32 %v2719, %v483
        %v2764 = vmul.f32 %v2732, %v483
        %v2765 = vmul.f32 %v2745, %v483
        %v2766 = vmul.f32 %v2758, %v483
        %vm2775 = vcmask 1041409
        %v2776 = vsel %vm2775, %v2760, %v2759
        %vm2777 = vcmask 1042434
        %v2778 = vsel %vm2777, %v2761, %v2776
        %vm2779 = vcmask 1043459
        %v2780 = vsel %vm2779, %v2762, %v2778
        %vm2781 = vcmask 1044484
        %v2782 = vsel %vm2781, %v2763, %v2780
        %vm2783 = vcmask 1045509
        %v2784 = vsel %vm2783, %v2764, %v2782
        %vm2785 = vcmask 1046534
        %v2786 = vsel %vm2785, %v2765, %v2784
        %vm2787 = vcmask 1047559
        %v2788 = vsel %vm2787, %v2766, %v2786
        %2790 = vst [vmem:[%s166] sm:$0xff] %v2788
        %s2791 = sand.u32 %s93, 1
        %s2792 = scalar_lea.sflag [#allocation3], %s2791
        %s2793 = sand.u32 %s93, 1
        %s2794 = smul.addr %s2793, 8
        %s2795 = scalar_lea.vmem [#allocation2], %s2794
        // Predicated region
        $region33: #{net_ibn_forward.1} parent=31 // pred_check
          %p2796 = pneg %p103
        $region34: #{net_ibn_forward.1} parent=31 // pred_check_branch
          %2798 = sbr.rel (%p2796) target = $region36
        $region35: #{net_ibn_forward.1} parent=31 // pred_region
          %s2800 = ssub.s32 128, 128
          %2801 = vsyncadd %s2792, %s2800
          %s2802 = smul.addr %s17, 128
          %s2803 = scalar_lea.hbm %s3, %s2802
          %s2805 = sshll.u32 %s2795, 4
          %s2806 = int_to_ptr.vmem [resolvable:$true] %s2805
          %2808 = dma.vmem_to_hbm [thread:$0]  %s2806, 128, %s2803, %s2792
        $region36: #{net_ibn_forward.1} parent=31 // pred_fallthru
          _
      $region32: #{net_ibn_forward.1} parent=5 // pred_fallthru
        _
      %p2809 = scmp.le.s32.totalorder 2, %s12
      // Predicated region
      $region37: #{net_ibn_forward.1} parent=5 // pred_check
        %p2810 = pneg %p2809
      $region38: #{net_ibn_forward.1} parent=5 // pred_check_branch
        %2812 = sbr.rel (%p2810) target = $region40
      $region39: #{net_ibn_forward.1} parent=5 // pred_region
        %s2813 = ssub.s32 %s12, 2
        // Predicated region
        $region41: #{net_ibn_forward.1} parent=39 // pred_check
          %p2814 = pneg %p109
        $region42: #{net_ibn_forward.1} parent=39 // pred_check_branch
          %2816 = sbr.rel (%p2814) target = $region44
        $region43: #{net_ibn_forward.1} parent=39 // pred_region
          %s2817 = sand.u32 %s94, 1
          %s2818 = scalar_lea.sflag [#allocation3], %s2817
          %s2819 = sand.u32 %s94, 1
          %s2820 = smul.addr %s2819, 8
          %s2821 = scalar_lea.vmem [#allocation2], %s2820
          %2822 = dma.done %s2818, 128
        $region44: #{net_ibn_forward.1} parent=39 // pred_fallthru
          _
      $region40: #{net_ibn_forward.1} parent=5 // pred_fallthru
        _
    $region6: #{net_ibn_forward.1} parent=1 // loop_footer
      %s16 = sadd.s32 1, %s12
    $region7: #{net_ibn_forward.1} parent=1 // loop_footer_branch
      %11 = sbr.rel target = $region3
    $region8: #{net_ibn_forward.1} parent=1 // loop_exit
      _
    %2823 = vsyncpa [#allocation3], 1
    %s2824 = scalar_lea.sflag [#allocation3], 1
    %2825 = vsyncpa %s2824, 1

</llo_original>
